<compile_context>
chip_gen: v5e
topology: v5e:2x2
jax: 0.10.0
libtpu: 0.0.40
codegen_flags: <defaults>
</compile_context>

<pallas_src>
import jax
import jax.numpy as jnp
from jax import lax
from jax.experimental import pallas as pl
from jax.experimental.pallas import tpu as pltpu

HIDDEN = 128
N_LAYERS = 2
N_CLASSES = 2


def _sigmoid(x):
    # exp on the EUP, approx reciprocal also on the EUP -> shorter VPU chain.
    return pl.reciprocal(1.0 + jnp.exp(-x), approx=True)


def _gru_kernel(x_ref,       # (T*Bp, Dp)  bf16   time-major, flattened, padded
                wih1_ref,    # (Dp, 3H)    bf16
                whh1_ref,    # (H, 3H)     bf16
                bi1_ref,     # (1, 3H)     f32    [b_ir+b_hr, b_iz+b_hz, b_in]
                bhn1_ref,    # (1, H)      f32    b_hn (layer 1)
                wih2_ref,    # (H, 3H)     bf16
                whh2_ref,    # (H, 3H)     bf16
                bi2_ref,     # (1, 3H)     f32    [b_ir+b_hr, b_iz+b_hz, b_in]
                bhn2_ref,    # (1, H)      f32    b_hn (layer 2)
                feat_ref,    # (Bp, H)     f32    output: h2 at last timestep
                gi_ref,      # (T, Bp, 3H) f32    scratch: hoisted proj (reused L1->L2)
                h1seq_ref):  # (T, Bp, H)  f32    scratch: full layer-1 output sequence
    H = HIDDEN
    T, Bp, _ = gi_ref.shape

    def gates(gi, gh, bhn, h):
        rz = _sigmoid(gi[:, :2 * H] + gh[:, :2 * H])
        r, z = rz[:, :H], rz[:, H:]
        n = jnp.tanh(gi[:, 2 * H:] + r * (gh[:, 2 * H:] + bhn))
        return (1.0 - z) * n + z * h

    h0 = jnp.zeros((Bp, H), jnp.float32)

    # ---- Layer 1, phase A (hoisted): input projection for all timesteps as
    # one large MXU matmul.  r,z biases are pre-folded, n-gate b_in included.
    gi1_all = (jnp.dot(x_ref[...], wih1_ref[...],
                       preferred_element_type=jnp.float32)
               + bi1_ref[...])                                # (T*Bp, 3H) f32
    gi_ref[...] = gi1_all.reshape(T, Bp, 3 * H)

    whh1 = whh1_ref[...]
    bhn1 = jnp.broadcast_to(bhn1_ref[...], (Bp, H))

    # ---- Layer 1, phase B: serial recurrence; only h1 @ W_hh1 per step.
    def step1(t, h1):
        gi = gi_ref[t]                                        # (Bp, 3H) f32
        gh = jnp.dot(h1.astype(jnp.bfloat16), whh1,
                     preferred_element_type=jnp.float32)
        h1n = gates(gi, gh, bhn1, h1)
        h1seq_ref[t] = h1n
        return h1n

    lax.fori_loop(0, T, step1, h0, unroll=True)

    # ---- Layer 2, phase A (hoisted): input projection of the whole h1
    # sequence as one large MXU matmul; reuse the gi scratch.
    h1_flat = h1seq_ref[...].reshape(T * Bp, H).astype(jnp.bfloat16)
    gi2_all = (jnp.dot(h1_flat, wih2_ref[...],
                       preferred_element_type=jnp.float32)
               + bi2_ref[...])                                # (T*Bp, 3H) f32
    gi_ref[...] = gi2_all.reshape(T, Bp, 3 * H)

    whh2 = whh2_ref[...]
    bhn2 = jnp.broadcast_to(bhn2_ref[...], (Bp, H))

    # ---- Layer 2, phase B: serial recurrence; only h2 @ W_hh2 per step.
    def step2(t, h2):
        gi = gi_ref[t]
        gh = jnp.dot(h2.astype(jnp.bfloat16), whh2,
                     preferred_element_type=jnp.float32)
        return gates(gi, gh, bhn2, h2)

    h2_final = lax.fori_loop(0, T, step2, h0, unroll=True)
    feat_ref[...] = h2_final


def pack_params(params, num_roi):
    """One-time weight packing: pad / cast / fold biases OUTSIDE the per-call
    path so the per-call wrapper does no weight reshuffling."""
    H = HIDDEN
    (wih1, whh1, bih1, bhh1, wih2, whh2, bih2, bhh2, wfc, bfc) = params
    Dp = max(128, -(-num_roi // 128) * 128)

    wih1_p = jnp.pad(wih1, ((0, Dp - num_roi), (0, 0))).astype(jnp.bfloat16)
    whh1_b = whh1.astype(jnp.bfloat16)
    wih2_b = wih2.astype(jnp.bfloat16)
    whh2_b = whh2.astype(jnp.bfloat16)

    # Pre-fold r,z biases (input + hidden); keep n-gate biases split
    # (PyTorch: n = tanh(W_in x + b_in + r * (W_hn h + b_hn))).
    bi1 = jnp.concatenate(
        [bih1[:, :2 * H] + bhh1[:, :2 * H], bih1[:, 2 * H:]], axis=1)
    bhn1 = bhh1[:, 2 * H:]
    bi2 = jnp.concatenate(
        [bih2[:, :2 * H] + bhh2[:, :2 * H], bih2[:, 2 * H:]], axis=1)
    bhn2 = bhh2[:, 2 * H:]

    return (wih1_p, whh1_b, bi1, bhn1, wih2_b, whh2_b, bi2, bhn2, wfc, bfc)


def gru_forward(x, packed):
    """x: (B, T, D) float32, packed = pack_params(...).
    Returns (logits (B, 2), features (B, 128))."""
    B, T, D = x.shape
    H = HIDDEN
    (wih1_p, whh1_b, bi1, bhn1, wih2_b, whh2_b, bi2, bhn2, wfc, bfc) = packed
    Dp = wih1_p.shape[0]
    Bp = max(8, -(-B // 8) * 8)

    # Per-call input prep only: time-major, pad batch to sublanes and features
    # to lanes, flatten for the hoisted layer-1 projection, cast to bf16.
    x_tbd = jnp.transpose(x, (1, 0, 2))
    x_pad = jnp.pad(x_tbd, ((0, 0), (0, Bp - B), (0, Dp - D)))
    x_flat = x_pad.reshape(T * Bp, Dp).astype(jnp.bfloat16)

    grid_spec = pltpu.PrefetchScalarGridSpec(
        num_scalar_prefetch=0,
        grid=(1,),  # whole problem in one invocation; time loops run in-kernel
        in_specs=[
            pl.BlockSpec((T * Bp, Dp), lambda i: (0, 0)),
            pl.BlockSpec((Dp, 3 * H), lambda i: (0, 0)),
            pl.BlockSpec((H, 3 * H), lambda i: (0, 0)),
            pl.BlockSpec((1, 3 * H), lambda i: (0, 0)),
            pl.BlockSpec((1, H), lambda i: (0, 0)),
            pl.BlockSpec((H, 3 * H), lambda i: (0, 0)),
            pl.BlockSpec((H, 3 * H), lambda i: (0, 0)),
            pl.BlockSpec((1, 3 * H), lambda i: (0, 0)),
            pl.BlockSpec((1, H), lambda i: (0, 0)),
        ],
        out_specs=pl.BlockSpec((Bp, H), lambda i: (0, 0)),
        scratch_shapes=[
            pltpu.VMEM((T, Bp, 3 * H), jnp.float32),  # gi scratch (reused L1->L2)
            pltpu.VMEM((T, Bp, H), jnp.float32),      # layer-1 output sequence
        ],
    )

    features_pad = pl.pallas_call(
        _gru_kernel,
        out_shape=jax.ShapeDtypeStruct((Bp, H), jnp.float32),
        grid_spec=grid_spec,
        compiler_params=pltpu.CompilerParams(
            dimension_semantics=("arbitrary",),
        ),
    )(x_flat, wih1_p, whh1_b, bi1, bhn1, wih2_b, whh2_b, bi2, bhn2)

    features = features_pad[:B]
    # Tiny (128, 2) classifier head stays in the wrapper (f32).
    logits = features @ wfc + bfc
    return logits, features


def init_params(key, num_roi):
    """Deterministic init matching torch.nn.GRU / Linear parameter shapes
    (stored transposed as (in, out)); uniform(-1/sqrt(H), 1/sqrt(H))."""
    H = HIDDEN
    bound = 1.0 / jnp.sqrt(jnp.float32(H))
    keys = jax.random.split(key, 10)
    u = lambda k, shape: jax.random.uniform(k, shape, jnp.float32, -bound, bound)
    wih1 = u(keys[0], (num_roi, 3 * H))   # torch weight_ih_l0 (3H, D) transposed
    whh1 = u(keys[1], (H, 3 * H))
    bih1 = u(keys[2], (1, 3 * H))
    bhh1 = u(keys[3], (1, 3 * H))
    wih2 = u(keys[4], (H, 3 * H))         # layer 2 input size == hidden
    whh2 = u(keys[5], (H, 3 * H))
    bih2 = u(keys[6], (1, 3 * H))
    bhh2 = u(keys[7], (1, 3 * H))
    wfc = u(keys[8], (H, N_CLASSES))      # torch fc.weight (2, 128) transposed
    bfc = u(keys[9], (1, N_CLASSES))
    return (wih1, whh1, bih1, bhh1, wih2, whh2, bih2, bhh2, wfc, bfc)


def gru_reference(x, params):
    """Pure-JAX f32 reference mirroring torch.nn.GRU(batch_first=True)."""
    H = HIDDEN
    (wih1, whh1, bih1, bhh1, wih2, whh2, bih2, bhh2, wfc, bfc) = params
    B, T, D = x.shape

    def cell(x_t, h, wih, whh, bih, bhh):
        gi = x_t @ wih + bih
        gh = h @ whh + bhh
        r = jax.nn.sigmoid(gi[:, :H] + gh[:, :H])
        z = jax.nn.sigmoid(gi[:, H:2 * H] + gh[:, H:2 * H])
        n = jnp.tanh(gi[:, 2 * H:] + r * gh[:, 2 * H:])
        return (1.0 - z) * n + z * h

    h1 = jnp.zeros((B, H), jnp.float32)
    h2 = jnp.zeros((B, H), jnp.float32)
    for t in range(T):
        h1 = cell(x[:, t, :], h1, wih1, whh1, bih1, bhh1)
        h2 = cell(h1, h2, wih2, whh2, bih2, bhh2)
    features = h2
    logits = features @ wfc + bfc
    return logits, features


if __name__ == "__main__":
    key = jax.random.PRNGKey(0)
    k_x, k_p = jax.random.split(key)

    batch, seq, num_roi = 2, 8, 64  # data['timeseries']: (B, T, num_roi)
    x = jax.random.normal(k_x, (batch, seq, num_roi), dtype=jnp.float32)
    params = init_params(k_p, num_roi)

    packed = pack_params(params, num_roi)          # one-time weight packing
    fwd = jax.jit(gru_forward)
    logits, features = fwd(x, packed)
    jax.block_until_ready((logits, features))

    ref_logits, ref_features = gru_reference(x, params)
    assert logits.shape == (batch, N_CLASSES)
    assert features.shape == (batch, HIDDEN)
    # bf16 matmul operands + EUP approx reciprocal in the kernel vs. f32
    # reference -> relaxed tolerance.
    assert jnp.allclose(features, ref_features, rtol=4e-2, atol=4e-2)
    assert jnp.allclose(logits, ref_logits, rtol=4e-2, atol=4e-2)

    print("KERNEL_OK")
</pallas_src>

<mosaic_0001>
module attributes {stable_mosaic.version = 11 : i64} {
  func.func @_gru_kernel(%arg0: i32, %arg1: memref<64x128xbf16, #tpu.memory_space<vmem>>, %arg2: memref<128x384xbf16, #tpu.memory_space<vmem>>, %arg3: memref<128x384xbf16, #tpu.memory_space<vmem>>, %arg4: memref<1x384xf32, #tpu.memory_space<vmem>>, %arg5: memref<1x128xf32, #tpu.memory_space<vmem>>, %arg6: memref<128x384xbf16, #tpu.memory_space<vmem>>, %arg7: memref<128x384xbf16, #tpu.memory_space<vmem>>, %arg8: memref<1x384xf32, #tpu.memory_space<vmem>>, %arg9: memref<1x128xf32, #tpu.memory_space<vmem>>, %arg10: memref<8x128xf32, #tpu.memory_space<vmem>>, %arg11: memref<8x8x384xf32, #tpu.memory_space<vmem>>, %arg12: memref<8x8x128xf32, #tpu.memory_space<vmem>>) attributes {dimension_semantics = [#tpu.dimension_semantics<arbitrary>], iteration_bounds = array<i64: 1>, scalar_prefetch = 0 : i64, scratch_operands = 2 : i64, tpu.core_type = #tpu.core_type<tc>, window_params = [{pipeline_mode = #tpu.pipeline_mode<synchronous>, transform_indices = @transform_0, window_bounds = array<i64: 64, 128>}, {pipeline_mode = #tpu.pipeline_mode<synchronous>, transform_indices = @transform_1, window_bounds = array<i64: 128, 384>}, {pipeline_mode = #tpu.pipeline_mode<synchronous>, transform_indices = @transform_2, window_bounds = array<i64: 128, 384>}, {pipeline_mode = #tpu.pipeline_mode<synchronous>, transform_indices = @transform_3, window_bounds = array<i64: 1, 384>}, {pipeline_mode = #tpu.pipeline_mode<synchronous>, transform_indices = @transform_4, window_bounds = array<i64: 1, 128>}, {pipeline_mode = #tpu.pipeline_mode<synchronous>, transform_indices = @transform_5, window_bounds = array<i64: 128, 384>}, {pipeline_mode = #tpu.pipeline_mode<synchronous>, transform_indices = @transform_6, window_bounds = array<i64: 128, 384>}, {pipeline_mode = #tpu.pipeline_mode<synchronous>, transform_indices = @transform_7, window_bounds = array<i64: 1, 384>}, {pipeline_mode = #tpu.pipeline_mode<synchronous>, transform_indices = @transform_8, window_bounds = array<i64: 1, 128>}, {pipeline_mode = #tpu.pipeline_mode<synchronous>, transform_indices = @transform_9, window_bounds = array<i64: 8, 128>}]} {
    %cst = arith.constant 0.000000e+00 : f32
    %0 = vector.broadcast %cst : f32 to vector<8x128xf32>
    %c0 = arith.constant 0 : index
    %c0_0 = arith.constant 0 : index
    %1 = vector.load %arg1[%c0, %c0_0] : memref<64x128xbf16, #tpu.memory_space<vmem>>, vector<64x128xbf16>
    %c0_1 = arith.constant 0 : index
    %c0_2 = arith.constant 0 : index
    %2 = vector.load %arg2[%c0_1, %c0_2] : memref<128x384xbf16, #tpu.memory_space<vmem>>, vector<128x384xbf16>
    %cst_3 = arith.constant dense<0.000000e+00> : vector<64x384xf32>
    %3 = tpu.matmul %1, %2, %cst_3 {dimension_numbers = #tpu.dot_dimension_numbers<[1], [0], [0], [1], [0, 0, 1, 1], [], []>} : vector<64x128xbf16>, vector<128x384xbf16>, vector<64x384xf32> -> vector<64x384xf32>
    %c0_4 = arith.constant 0 : index
    %c0_5 = arith.constant 0 : index
    %4 = vector.load %arg4[%c0_4, %c0_5] : memref<1x384xf32, #tpu.memory_space<vmem>>, vector<1x384xf32>
    %5 = vector.broadcast %4 : vector<1x384xf32> to vector<64x384xf32>
    %6 = arith.addf %3, %5 : vector<64x384xf32>
    %7 = vector.shape_cast %6 : vector<64x384xf32> to vector<8x8x384xf32>
    %c0_6 = arith.constant 0 : index
    %c0_7 = arith.constant 0 : index
    %c0_8 = arith.constant 0 : index
    %8 = vector.load %arg11[%c0_6, %c0_7, %c0_8] : memref<8x8x384xf32, #tpu.memory_space<vmem>>, vector<8x8x384xf32>
    tpu.vector_store %arg11[%c0_6, %c0_7, %c0_8], %7 {strides = array<i32>} : memref<8x8x384xf32, #tpu.memory_space<vmem>>, vector<8x8x384xf32>,
    %c0_9 = arith.constant 0 : index
    %c0_10 = arith.constant 0 : index
    %9 = vector.load %arg3[%c0_9, %c0_10] : memref<128x384xbf16, #tpu.memory_space<vmem>>, vector<128x384xbf16>
    %c0_11 = arith.constant 0 : index
    %c0_12 = arith.constant 0 : index
    %10 = vector.load %arg5[%c0_11, %c0_12] : memref<1x128xf32, #tpu.memory_space<vmem>>, vector<1x128xf32>
    %11 = vector.shape_cast %10 : vector<1x128xf32> to vector<1x128xf32>
    %12 = vector.broadcast %11 : vector<1x128xf32> to vector<8x128xf32>
    %c0_i32 = arith.constant 0 : i32
    %13 = arith.index_cast %c0_i32 : i32 to index
    %c0_13 = arith.constant 0 : index
    %c0_14 = arith.constant 0 : index
    %14 = vector.load %arg11[%13, %c0_13, %c0_14] : memref<8x8x384xf32, #tpu.memory_space<vmem>>, vector<1x8x384xf32>
    %15 = vector.shape_cast %14 : vector<1x8x384xf32> to vector<8x384xf32>
    %16 = arith.truncf %0 : vector<8x128xf32> to vector<8x128xbf16>
    %cst_15 = arith.constant dense<0.000000e+00> : vector<8x384xf32>
    %17 = tpu.matmul %16, %9, %cst_15 {dimension_numbers = #tpu.dot_dimension_numbers<[1], [0], [0], [1], [0, 0, 1, 1], [], []>} : vector<8x128xbf16>, vector<128x384xbf16>, vector<8x384xf32> -> vector<8x384xf32>
    %18 = vector.extract_strided_slice %15 {offsets = [0, 0], sizes = [8, 256], strides = [1, 1]} : vector<8x384xf32> to vector<8x256xf32>
    %19 = vector.extract_strided_slice %17 {offsets = [0, 0], sizes = [8, 256], strides = [1, 1]} : vector<8x384xf32> to vector<8x256xf32>
    %20 = arith.addf %18, %19 : vector<8x256xf32>
    %cst_16 = arith.constant 0.000000e+00 : f32
    %21 = vector.broadcast %cst_16 : f32 to vector<8x256xf32>
    %22 = arith.subf %21, %20 : vector<8x256xf32>
    %23 = math.exp %22 : vector<8x256xf32>
    %cst_17 = arith.constant 1.000000e+00 : f32
    %24 = vector.broadcast %cst_17 : f32 to vector<8x256xf32>
    %25 = arith.addf %24, %23 : vector<8x256xf32>
    %26 = tpu.reciprocal %25 {approx = true} : vector<8x256xf32> -> vector<8x256xf32>
    %27 = vector.extract_strided_slice %26 {offsets = [0, 0], sizes = [8, 128], strides = [1, 1]} : vector<8x256xf32> to vector<8x128xf32>
    %28 = vector.extract_strided_slice %26 {offsets = [0, 128], sizes = [8, 128], strides = [1, 1]} : vector<8x256xf32> to vector<8x128xf32>
    %29 = vector.extract_strided_slice %15 {offsets = [0, 256], sizes = [8, 128], strides = [1, 1]} : vector<8x384xf32> to vector<8x128xf32>
    %30 = vector.extract_strided_slice %17 {offsets = [0, 256], sizes = [8, 128], strides = [1, 1]} : vector<8x384xf32> to vector<8x128xf32>
    %31 = arith.addf %30, %12 : vector<8x128xf32>
    %32 = arith.mulf %27, %31 : vector<8x128xf32>
    %33 = arith.addf %29, %32 : vector<8x128xf32>
    %34 = math.tanh %33 : vector<8x128xf32>
    %cst_18 = arith.constant 1.000000e+00 : f32
    %35 = vector.broadcast %cst_18 : f32 to vector<8x128xf32>
    %36 = arith.subf %35, %28 : vector<8x128xf32>
    %37 = arith.mulf %36, %34 : vector<8x128xf32>
    %38 = arith.mulf %28, %0 : vector<8x128xf32>
    %39 = arith.addf %37, %38 : vector<8x128xf32>
    %40 = arith.index_cast %c0_i32 : i32 to index
    %c0_19 = arith.constant 0 : index
    %c0_20 = arith.constant 0 : index
    %41 = vector.load %arg12[%40, %c0_19, %c0_20] : memref<8x8x128xf32, #tpu.memory_space<vmem>>, vector<1x8x128xf32>
    %42 = vector.shape_cast %41 : vector<1x8x128xf32> to vector<8x128xf32>
    %43 = vector.shape_cast %39 : vector<8x128xf32> to vector<1x8x128xf32>
    tpu.vector_store %arg12[%40, %c0_19, %c0_20], %43 {strides = array<i32>} : memref<8x8x128xf32, #tpu.memory_space<vmem>>, vector<1x8x128xf32>,
    %c1_i32 = arith.constant 1 : i32
    %44 = arith.index_cast %c1_i32 : i32 to index
    %c0_21 = arith.constant 0 : index
    %c0_22 = arith.constant 0 : index
    %45 = vector.load %arg11[%44, %c0_21, %c0_22] : memref<8x8x384xf32, #tpu.memory_space<vmem>>, vector<1x8x384xf32>
    %46 = vector.shape_cast %45 : vector<1x8x384xf32> to vector<8x384xf32>
    %47 = arith.truncf %39 : vector<8x128xf32> to vector<8x128xbf16>
    %cst_23 = arith.constant dense<0.000000e+00> : vector<8x384xf32>
    %48 = tpu.matmul %47, %9, %cst_23 {dimension_numbers = #tpu.dot_dimension_numbers<[1], [0], [0], [1], [0, 0, 1, 1], [], []>} : vector<8x128xbf16>, vector<128x384xbf16>, vector<8x384xf32> -> vector<8x384xf32>
    %49 = vector.extract_strided_slice %46 {offsets = [0, 0], sizes = [8, 256], strides = [1, 1]} : vector<8x384xf32> to vector<8x256xf32>
    %50 = vector.extract_strided_slice %48 {offsets = [0, 0], sizes = [8, 256], strides = [1, 1]} : vector<8x384xf32> to vector<8x256xf32>
    %51 = arith.addf %49, %50 : vector<8x256xf32>
    %cst_24 = arith.constant 0.000000e+00 : f32
    %52 = vector.broadcast %cst_24 : f32 to vector<8x256xf32>
    %53 = arith.subf %52, %51 : vector<8x256xf32>
    %54 = math.exp %53 : vector<8x256xf32>
    %cst_25 = arith.constant 1.000000e+00 : f32
    %55 = vector.broadcast %cst_25 : f32 to vector<8x256xf32>
    %56 = arith.addf %55, %54 : vector<8x256xf32>
    %57 = tpu.reciprocal %56 {approx = true} : vector<8x256xf32> -> vector<8x256xf32>
    %58 = vector.extract_strided_slice %57 {offsets = [0, 0], sizes = [8, 128], strides = [1, 1]} : vector<8x256xf32> to vector<8x128xf32>
    %59 = vector.extract_strided_slice %57 {offsets = [0, 128], sizes = [8, 128], strides = [1, 1]} : vector<8x256xf32> to vector<8x128xf32>
    %60 = vector.extract_strided_slice %46 {offsets = [0, 256], sizes = [8, 128], strides = [1, 1]} : vector<8x384xf32> to vector<8x128xf32>
    %61 = vector.extract_strided_slice %48 {offsets = [0, 256], sizes = [8, 128], strides = [1, 1]} : vector<8x384xf32> to vector<8x128xf32>
    %62 = arith.addf %61, %12 : vector<8x128xf32>
    %63 = arith.mulf %58, %62 : vector<8x128xf32>
    %64 = arith.addf %60, %63 : vector<8x128xf32>
    %65 = math.tanh %64 : vector<8x128xf32>
    %cst_26 = arith.constant 1.000000e+00 : f32
    %66 = vector.broadcast %cst_26 : f32 to vector<8x128xf32>
    %67 = arith.subf %66, %59 : vector<8x128xf32>
    %68 = arith.mulf %67, %65 : vector<8x128xf32>
    %69 = arith.mulf %59, %39 : vector<8x128xf32>
    %70 = arith.addf %68, %69 : vector<8x128xf32>
    %71 = arith.index_cast %c1_i32 : i32 to index
    %c0_27 = arith.constant 0 : index
    %c0_28 = arith.constant 0 : index
    %72 = vector.load %arg12[%71, %c0_27, %c0_28] : memref<8x8x128xf32, #tpu.memory_space<vmem>>, vector<1x8x128xf32>
    %73 = vector.shape_cast %72 : vector<1x8x128xf32> to vector<8x128xf32>
    %74 = vector.shape_cast %70 : vector<8x128xf32> to vector<1x8x128xf32>
    tpu.vector_store %arg12[%71, %c0_27, %c0_28], %74 {strides = array<i32>} : memref<8x8x128xf32, #tpu.memory_space<vmem>>, vector<1x8x128xf32>,
    %c2_i32 = arith.constant 2 : i32
    %75 = arith.index_cast %c2_i32 : i32 to index
    %c0_29 = arith.constant 0 : index
    %c0_30 = arith.constant 0 : index
    %76 = vector.load %arg11[%75, %c0_29, %c0_30] : memref<8x8x384xf32, #tpu.memory_space<vmem>>, vector<1x8x384xf32>
    %77 = vector.shape_cast %76 : vector<1x8x384xf32> to vector<8x384xf32>
    %78 = arith.truncf %70 : vector<8x128xf32> to vector<8x128xbf16>
    %cst_31 = arith.constant dense<0.000000e+00> : vector<8x384xf32>
    %79 = tpu.matmul %78, %9, %cst_31 {dimension_numbers = #tpu.dot_dimension_numbers<[1], [0], [0], [1], [0, 0, 1, 1], [], []>} : vector<8x128xbf16>, vector<128x384xbf16>, vector<8x384xf32> -> vector<8x384xf32>
    %80 = vector.extract_strided_slice %77 {offsets = [0, 0], sizes = [8, 256], strides = [1, 1]} : vector<8x384xf32> to vector<8x256xf32>
    %81 = vector.extract_strided_slice %79 {offsets = [0, 0], sizes = [8, 256], strides = [1, 1]} : vector<8x384xf32> to vector<8x256xf32>
    %82 = arith.addf %80, %81 : vector<8x256xf32>
    %cst_32 = arith.constant 0.000000e+00 : f32
    %83 = vector.broadcast %cst_32 : f32 to vector<8x256xf32>
    %84 = arith.subf %83, %82 : vector<8x256xf32>
    %85 = math.exp %84 : vector<8x256xf32>
    %cst_33 = arith.constant 1.000000e+00 : f32
    %86 = vector.broadcast %cst_33 : f32 to vector<8x256xf32>
    %87 = arith.addf %86, %85 : vector<8x256xf32>
    %88 = tpu.reciprocal %87 {approx = true} : vector<8x256xf32> -> vector<8x256xf32>
    %89 = vector.extract_strided_slice %88 {offsets = [0, 0], sizes = [8, 128], strides = [1, 1]} : vector<8x256xf32> to vector<8x128xf32>
    %90 = vector.extract_strided_slice %88 {offsets = [0, 128], sizes = [8, 128], strides = [1, 1]} : vector<8x256xf32> to vector<8x128xf32>
    %91 = vector.extract_strided_slice %77 {offsets = [0, 256], sizes = [8, 128], strides = [1, 1]} : vector<8x384xf32> to vector<8x128xf32>
    %92 = vector.extract_strided_slice %79 {offsets = [0, 256], sizes = [8, 128], strides = [1, 1]} : vector<8x384xf32> to vector<8x128xf32>
    %93 = arith.addf %92, %12 : vector<8x128xf32>
    %94 = arith.mulf %89, %93 : vector<8x128xf32>
    %95 = arith.addf %91, %94 : vector<8x128xf32>
    %96 = math.tanh %95 : vector<8x128xf32>
    %cst_34 = arith.constant 1.000000e+00 : f32
    %97 = vector.broadcast %cst_34 : f32 to vector<8x128xf32>
    %98 = arith.subf %97, %90 : vector<8x128xf32>
    %99 = arith.mulf %98, %96 : vector<8x128xf32>
    %100 = arith.mulf %90, %70 : vector<8x128xf32>
    %101 = arith.addf %99, %100 : vector<8x128xf32>
    %102 = arith.index_cast %c2_i32 : i32 to index
    %c0_35 = arith.constant 0 : index
    %c0_36 = arith.constant 0 : index
    %103 = vector.load %arg12[%102, %c0_35, %c0_36] : memref<8x8x128xf32, #tpu.memory_space<vmem>>, vector<1x8x128xf32>
    %104 = vector.shape_cast %103 : vector<1x8x128xf32> to vector<8x128xf32>
    %105 = vector.shape_cast %101 : vector<8x128xf32> to vector<1x8x128xf32>
    tpu.vector_store %arg12[%102, %c0_35, %c0_36], %105 {strides = array<i32>} : memref<8x8x128xf32, #tpu.memory_space<vmem>>, vector<1x8x128xf32>,
    %c3_i32 = arith.constant 3 : i32
    %106 = arith.index_cast %c3_i32 : i32 to index
    %c0_37 = arith.constant 0 : index
    %c0_38 = arith.constant 0 : index
    %107 = vector.load %arg11[%106, %c0_37, %c0_38] : memref<8x8x384xf32, #tpu.memory_space<vmem>>, vector<1x8x384xf32>
    %108 = vector.shape_cast %107 : vector<1x8x384xf32> to vector<8x384xf32>
    %109 = arith.truncf %101 : vector<8x128xf32> to vector<8x128xbf16>
    %cst_39 = arith.constant dense<0.000000e+00> : vector<8x384xf32>
    %110 = tpu.matmul %109, %9, %cst_39 {dimension_numbers = #tpu.dot_dimension_numbers<[1], [0], [0], [1], [0, 0, 1, 1], [], []>} : vector<8x128xbf16>, vector<128x384xbf16>, vector<8x384xf32> -> vector<8x384xf32>
    %111 = vector.extract_strided_slice %108 {offsets = [0, 0], sizes = [8, 256], strides = [1, 1]} : vector<8x384xf32> to vector<8x256xf32>
    %112 = vector.extract_strided_slice %110 {offsets = [0, 0], sizes = [8, 256], strides = [1, 1]} : vector<8x384xf32> to vector<8x256xf32>
    %113 = arith.addf %111, %112 : vector<8x256xf32>
    %cst_40 = arith.constant 0.000000e+00 : f32
    %114 = vector.broadcast %cst_40 : f32 to vector<8x256xf32>
    %115 = arith.subf %114, %113 : vector<8x256xf32>
    %116 = math.exp %115 : vector<8x256xf32>
    %cst_41 = arith.constant 1.000000e+00 : f32
    %117 = vector.broadcast %cst_41 : f32 to vector<8x256xf32>
    %118 = arith.addf %117, %116 : vector<8x256xf32>
    %119 = tpu.reciprocal %118 {approx = true} : vector<8x256xf32> -> vector<8x256xf32>
    %120 = vector.extract_strided_slice %119 {offsets = [0, 0], sizes = [8, 128], strides = [1, 1]} : vector<8x256xf32> to vector<8x128xf32>
    %121 = vector.extract_strided_slice %119 {offsets = [0, 128], sizes = [8, 128], strides = [1, 1]} : vector<8x256xf32> to vector<8x128xf32>
    %122 = vector.extract_strided_slice %108 {offsets = [0, 256], sizes = [8, 128], strides = [1, 1]} : vector<8x384xf32> to vector<8x128xf32>
    %123 = vector.extract_strided_slice %110 {offsets = [0, 256], sizes = [8, 128], strides = [1, 1]} : vector<8x384xf32> to vector<8x128xf32>
    %124 = arith.addf %123, %12 : vector<8x128xf32>
    %125 = arith.mulf %120, %124 : vector<8x128xf32>
    %126 = arith.addf %122, %125 : vector<8x128xf32>
    %127 = math.tanh %126 : vector<8x128xf32>
    %cst_42 = arith.constant 1.000000e+00 : f32
    %128 = vector.broadcast %cst_42 : f32 to vector<8x128xf32>
    %129 = arith.subf %128, %121 : vector<8x128xf32>
    %130 = arith.mulf %129, %127 : vector<8x128xf32>
    %131 = arith.mulf %121, %101 : vector<8x128xf32>
    %132 = arith.addf %130, %131 : vector<8x128xf32>
    %133 = arith.index_cast %c3_i32 : i32 to index
    %c0_43 = arith.constant 0 : index
    %c0_44 = arith.constant 0 : index
    %134 = vector.load %arg12[%133, %c0_43, %c0_44] : memref<8x8x128xf32, #tpu.memory_space<vmem>>, vector<1x8x128xf32>
    %135 = vector.shape_cast %134 : vector<1x8x128xf32> to vector<8x128xf32>
    %136 = vector.shape_cast %132 : vector<8x128xf32> to vector<1x8x128xf32>
    tpu.vector_store %arg12[%133, %c0_43, %c0_44], %136 {strides = array<i32>} : memref<8x8x128xf32, #tpu.memory_space<vmem>>, vector<1x8x128xf32>,
    %c4_i32 = arith.constant 4 : i32
    %137 = arith.index_cast %c4_i32 : i32 to index
    %c0_45 = arith.constant 0 : index
    %c0_46 = arith.constant 0 : index
    %138 = vector.load %arg11[%137, %c0_45, %c0_46] : memref<8x8x384xf32, #tpu.memory_space<vmem>>, vector<1x8x384xf32>
    %139 = vector.shape_cast %138 : vector<1x8x384xf32> to vector<8x384xf32>
    %140 = arith.truncf %132 : vector<8x128xf32> to vector<8x128xbf16>
    %cst_47 = arith.constant dense<0.000000e+00> : vector<8x384xf32>
    %141 = tpu.matmul %140, %9, %cst_47 {dimension_numbers = #tpu.dot_dimension_numbers<[1], [0], [0], [1], [0, 0, 1, 1], [], []>} : vector<8x128xbf16>, vector<128x384xbf16>, vector<8x384xf32> -> vector<8x384xf32>
    %142 = vector.extract_strided_slice %139 {offsets = [0, 0], sizes = [8, 256], strides = [1, 1]} : vector<8x384xf32> to vector<8x256xf32>
    %143 = vector.extract_strided_slice %141 {offsets = [0, 0], sizes = [8, 256], strides = [1, 1]} : vector<8x384xf32> to vector<8x256xf32>
    %144 = arith.addf %142, %143 : vector<8x256xf32>
    %cst_48 = arith.constant 0.000000e+00 : f32
    %145 = vector.broadcast %cst_48 : f32 to vector<8x256xf32>
    %146 = arith.subf %145, %144 : vector<8x256xf32>
    %147 = math.exp %146 : vector<8x256xf32>
    %cst_49 = arith.constant 1.000000e+00 : f32
    %148 = vector.broadcast %cst_49 : f32 to vector<8x256xf32>
    %149 = arith.addf %148, %147 : vector<8x256xf32>
    %150 = tpu.reciprocal %149 {approx = true} : vector<8x256xf32> -> vector<8x256xf32>
    %151 = vector.extract_strided_slice %150 {offsets = [0, 0], sizes = [8, 128], strides = [1, 1]} : vector<8x256xf32> to vector<8x128xf32>
    %152 = vector.extract_strided_slice %150 {offsets = [0, 128], sizes = [8, 128], strides = [1, 1]} : vector<8x256xf32> to vector<8x128xf32>
    %153 = vector.extract_strided_slice %139 {offsets = [0, 256], sizes = [8, 128], strides = [1, 1]} : vector<8x384xf32> to vector<8x128xf32>
    %154 = vector.extract_strided_slice %141 {offsets = [0, 256], sizes = [8, 128], strides = [1, 1]} : vector<8x384xf32> to vector<8x128xf32>
    %155 = arith.addf %154, %12 : vector<8x128xf32>
    %156 = arith.mulf %151, %155 : vector<8x128xf32>
    %157 = arith.addf %153, %156 : vector<8x128xf32>
    %158 = math.tanh %157 : vector<8x128xf32>
    %cst_50 = arith.constant 1.000000e+00 : f32
    %159 = vector.broadcast %cst_50 : f32 to vector<8x128xf32>
    %160 = arith.subf %159, %152 : vector<8x128xf32>
    %161 = arith.mulf %160, %158 : vector<8x128xf32>
    %162 = arith.mulf %152, %132 : vector<8x128xf32>
    %163 = arith.addf %161, %162 : vector<8x128xf32>
    %164 = arith.index_cast %c4_i32 : i32 to index
    %c0_51 = arith.constant 0 : index
    %c0_52 = arith.constant 0 : index
    %165 = vector.load %arg12[%164, %c0_51, %c0_52] : memref<8x8x128xf32, #tpu.memory_space<vmem>>, vector<1x8x128xf32>
    %166 = vector.shape_cast %165 : vector<1x8x128xf32> to vector<8x128xf32>
    %167 = vector.shape_cast %163 : vector<8x128xf32> to vector<1x8x128xf32>
    tpu.vector_store %arg12[%164, %c0_51, %c0_52], %167 {strides = array<i32>} : memref<8x8x128xf32, #tpu.memory_space<vmem>>, vector<1x8x128xf32>,
    %c5_i32 = arith.constant 5 : i32
    %168 = arith.index_cast %c5_i32 : i32 to index
    %c0_53 = arith.constant 0 : index
    %c0_54 = arith.constant 0 : index
    %169 = vector.load %arg11[%168, %c0_53, %c0_54] : memref<8x8x384xf32, #tpu.memory_space<vmem>>, vector<1x8x384xf32>
    %170 = vector.shape_cast %169 : vector<1x8x384xf32> to vector<8x384xf32>
    %171 = arith.truncf %163 : vector<8x128xf32> to vector<8x128xbf16>
    %cst_55 = arith.constant dense<0.000000e+00> : vector<8x384xf32>
    %172 = tpu.matmul %171, %9, %cst_55 {dimension_numbers = #tpu.dot_dimension_numbers<[1], [0], [0], [1], [0, 0, 1, 1], [], []>} : vector<8x128xbf16>, vector<128x384xbf16>, vector<8x384xf32> -> vector<8x384xf32>
    %173 = vector.extract_strided_slice %170 {offsets = [0, 0], sizes = [8, 256], strides = [1, 1]} : vector<8x384xf32> to vector<8x256xf32>
    %174 = vector.extract_strided_slice %172 {offsets = [0, 0], sizes = [8, 256], strides = [1, 1]} : vector<8x384xf32> to vector<8x256xf32>
    %175 = arith.addf %173, %174 : vector<8x256xf32>
    %cst_56 = arith.constant 0.000000e+00 : f32
    %176 = vector.broadcast %cst_56 : f32 to vector<8x256xf32>
    %177 = arith.subf %176, %175 : vector<8x256xf32>
    %178 = math.exp %177 : vector<8x256xf32>
    %cst_57 = arith.constant 1.000000e+00 : f32
    %179 = vector.broadcast %cst_57 : f32 to vector<8x256xf32>
    %180 = arith.addf %179, %178 : vector<8x256xf32>
    %181 = tpu.reciprocal %180 {approx = true} : vector<8x256xf32> -> vector<8x256xf32>
    %182 = vector.extract_strided_slice %181 {offsets = [0, 0], sizes = [8, 128], strides = [1, 1]} : vector<8x256xf32> to vector<8x128xf32>
    %183 = vector.extract_strided_slice %181 {offsets = [0, 128], sizes = [8, 128], strides = [1, 1]} : vector<8x256xf32> to vector<8x128xf32>
    %184 = vector.extract_strided_slice %170 {offsets = [0, 256], sizes = [8, 128], strides = [1, 1]} : vector<8x384xf32> to vector<8x128xf32>
    %185 = vector.extract_strided_slice %172 {offsets = [0, 256], sizes = [8, 128], strides = [1, 1]} : vector<8x384xf32> to vector<8x128xf32>
    %186 = arith.addf %185, %12 : vector<8x128xf32>
    %187 = arith.mulf %182, %186 : vector<8x128xf32>
    %188 = arith.addf %184, %187 : vector<8x128xf32>
    %189 = math.tanh %188 : vector<8x128xf32>
    %cst_58 = arith.constant 1.000000e+00 : f32
    %190 = vector.broadcast %cst_58 : f32 to vector<8x128xf32>
    %191 = arith.subf %190, %183 : vector<8x128xf32>
    %192 = arith.mulf %191, %189 : vector<8x128xf32>
    %193 = arith.mulf %183, %163 : vector<8x128xf32>
    %194 = arith.addf %192, %193 : vector<8x128xf32>
    %195 = arith.index_cast %c5_i32 : i32 to index
    %c0_59 = arith.constant 0 : index
    %c0_60 = arith.constant 0 : index
    %196 = vector.load %arg12[%195, %c0_59, %c0_60] : memref<8x8x128xf32, #tpu.memory_space<vmem>>, vector<1x8x128xf32>
    %197 = vector.shape_cast %196 : vector<1x8x128xf32> to vector<8x128xf32>
    %198 = vector.shape_cast %194 : vector<8x128xf32> to vector<1x8x128xf32>
    tpu.vector_store %arg12[%195, %c0_59, %c0_60], %198 {strides = array<i32>} : memref<8x8x128xf32, #tpu.memory_space<vmem>>, vector<1x8x128xf32>,
    %c6_i32 = arith.constant 6 : i32
    %199 = arith.index_cast %c6_i32 : i32 to index
    %c0_61 = arith.constant 0 : index
    %c0_62 = arith.constant 0 : index
    %200 = vector.load %arg11[%199, %c0_61, %c0_62] : memref<8x8x384xf32, #tpu.memory_space<vmem>>, vector<1x8x384xf32>
    %201 = vector.shape_cast %200 : vector<1x8x384xf32> to vector<8x384xf32>
    %202 = arith.truncf %194 : vector<8x128xf32> to vector<8x128xbf16>
    %cst_63 = arith.constant dense<0.000000e+00> : vector<8x384xf32>
    %203 = tpu.matmul %202, %9, %cst_63 {dimension_numbers = #tpu.dot_dimension_numbers<[1], [0], [0], [1], [0, 0, 1, 1], [], []>} : vector<8x128xbf16>, vector<128x384xbf16>, vector<8x384xf32> -> vector<8x384xf32>
    %204 = vector.extract_strided_slice %201 {offsets = [0, 0], sizes = [8, 256], strides = [1, 1]} : vector<8x384xf32> to vector<8x256xf32>
    %205 = vector.extract_strided_slice %203 {offsets = [0, 0], sizes = [8, 256], strides = [1, 1]} : vector<8x384xf32> to vector<8x256xf32>
    %206 = arith.addf %204, %205 : vector<8x256xf32>
    %cst_64 = arith.constant 0.000000e+00 : f32
    %207 = vector.broadcast %cst_64 : f32 to vector<8x256xf32>
    %208 = arith.subf %207, %206 : vector<8x256xf32>
    %209 = math.exp %208 : vector<8x256xf32>
    %cst_65 = arith.constant 1.000000e+00 : f32
    %210 = vector.broadcast %cst_65 : f32 to vector<8x256xf32>
    %211 = arith.addf %210, %209 : vector<8x256xf32>
    %212 = tpu.reciprocal %211 {approx = true} : vector<8x256xf32> -> vector<8x256xf32>
    %213 = vector.extract_strided_slice %212 {offsets = [0, 0], sizes = [8, 128], strides = [1, 1]} : vector<8x256xf32> to vector<8x128xf32>
    %214 = vector.extract_strided_slice %212 {offsets = [0, 128], sizes = [8, 128], strides = [1, 1]} : vector<8x256xf32> to vector<8x128xf32>
    %215 = vector.extract_strided_slice %201 {offsets = [0, 256], sizes = [8, 128], strides = [1, 1]} : vector<8x384xf32> to vector<8x128xf32>
    %216 = vector.extract_strided_slice %203 {offsets = [0, 256], sizes = [8, 128], strides = [1, 1]} : vector<8x384xf32> to vector<8x128xf32>
    %217 = arith.addf %216, %12 : vector<8x128xf32>
    %218 = arith.mulf %213, %217 : vector<8x128xf32>
    %219 = arith.addf %215, %218 : vector<8x128xf32>
    %220 = math.tanh %219 : vector<8x128xf32>
    %cst_66 = arith.constant 1.000000e+00 : f32
    %221 = vector.broadcast %cst_66 : f32 to vector<8x128xf32>
    %222 = arith.subf %221, %214 : vector<8x128xf32>
    %223 = arith.mulf %222, %220 : vector<8x128xf32>
    %224 = arith.mulf %214, %194 : vector<8x128xf32>
    %225 = arith.addf %223, %224 : vector<8x128xf32>
    %226 = arith.index_cast %c6_i32 : i32 to index
    %c0_67 = arith.constant 0 : index
    %c0_68 = arith.constant 0 : index
    %227 = vector.load %arg12[%226, %c0_67, %c0_68] : memref<8x8x128xf32, #tpu.memory_space<vmem>>, vector<1x8x128xf32>
    %228 = vector.shape_cast %227 : vector<1x8x128xf32> to vector<8x128xf32>
    %229 = vector.shape_cast %225 : vector<8x128xf32> to vector<1x8x128xf32>
    tpu.vector_store %arg12[%226, %c0_67, %c0_68], %229 {strides = array<i32>} : memref<8x8x128xf32, #tpu.memory_space<vmem>>, vector<1x8x128xf32>,
    %c7_i32 = arith.constant 7 : i32
    %230 = arith.index_cast %c7_i32 : i32 to index
    %c0_69 = arith.constant 0 : index
    %c0_70 = arith.constant 0 : index
    %231 = vector.load %arg11[%230, %c0_69, %c0_70] : memref<8x8x384xf32, #tpu.memory_space<vmem>>, vector<1x8x384xf32>
    %232 = vector.shape_cast %231 : vector<1x8x384xf32> to vector<8x384xf32>
    %233 = arith.truncf %225 : vector<8x128xf32> to vector<8x128xbf16>
    %cst_71 = arith.constant dense<0.000000e+00> : vector<8x384xf32>
    %234 = tpu.matmul %233, %9, %cst_71 {dimension_numbers = #tpu.dot_dimension_numbers<[1], [0], [0], [1], [0, 0, 1, 1], [], []>} : vector<8x128xbf16>, vector<128x384xbf16>, vector<8x384xf32> -> vector<8x384xf32>
    %235 = vector.extract_strided_slice %232 {offsets = [0, 0], sizes = [8, 256], strides = [1, 1]} : vector<8x384xf32> to vector<8x256xf32>
    %236 = vector.extract_strided_slice %234 {offsets = [0, 0], sizes = [8, 256], strides = [1, 1]} : vector<8x384xf32> to vector<8x256xf32>
    %237 = arith.addf %235, %236 : vector<8x256xf32>
    %cst_72 = arith.constant 0.000000e+00 : f32
    %238 = vector.broadcast %cst_72 : f32 to vector<8x256xf32>
    %239 = arith.subf %238, %237 : vector<8x256xf32>
    %240 = math.exp %239 : vector<8x256xf32>
    %cst_73 = arith.constant 1.000000e+00 : f32
    %241 = vector.broadcast %cst_73 : f32 to vector<8x256xf32>
    %242 = arith.addf %241, %240 : vector<8x256xf32>
    %243 = tpu.reciprocal %242 {approx = true} : vector<8x256xf32> -> vector<8x256xf32>
    %244 = vector.extract_strided_slice %243 {offsets = [0, 0], sizes = [8, 128], strides = [1, 1]} : vector<8x256xf32> to vector<8x128xf32>
    %245 = vector.extract_strided_slice %243 {offsets = [0, 128], sizes = [8, 128], strides = [1, 1]} : vector<8x256xf32> to vector<8x128xf32>
    %246 = vector.extract_strided_slice %232 {offsets = [0, 256], sizes = [8, 128], strides = [1, 1]} : vector<8x384xf32> to vector<8x128xf32>
    %247 = vector.extract_strided_slice %234 {offsets = [0, 256], sizes = [8, 128], strides = [1, 1]} : vector<8x384xf32> to vector<8x128xf32>
    %248 = arith.addf %247, %12 : vector<8x128xf32>
    %249 = arith.mulf %244, %248 : vector<8x128xf32>
    %250 = arith.addf %246, %249 : vector<8x128xf32>
    %251 = math.tanh %250 : vector<8x128xf32>
    %cst_74 = arith.constant 1.000000e+00 : f32
    %252 = vector.broadcast %cst_74 : f32 to vector<8x128xf32>
    %253 = arith.subf %252, %245 : vector<8x128xf32>
    %254 = arith.mulf %253, %251 : vector<8x128xf32>
    %255 = arith.mulf %245, %225 : vector<8x128xf32>
    %256 = arith.addf %254, %255 : vector<8x128xf32>
    %257 = arith.index_cast %c7_i32 : i32 to index
    %c0_75 = arith.constant 0 : index
    %c0_76 = arith.constant 0 : index
    %258 = vector.load %arg12[%257, %c0_75, %c0_76] : memref<8x8x128xf32, #tpu.memory_space<vmem>>, vector<1x8x128xf32>
    %259 = vector.shape_cast %258 : vector<1x8x128xf32> to vector<8x128xf32>
    %260 = vector.shape_cast %256 : vector<8x128xf32> to vector<1x8x128xf32>
    tpu.vector_store %arg12[%257, %c0_75, %c0_76], %260 {strides = array<i32>} : memref<8x8x128xf32, #tpu.memory_space<vmem>>, vector<1x8x128xf32>,
    %c8_i32 = arith.constant 8 : i32
    %c0_77 = arith.constant 0 : index
    %c0_78 = arith.constant 0 : index
    %c0_79 = arith.constant 0 : index
    %261 = vector.load %arg12[%c0_77, %c0_78, %c0_79] : memref<8x8x128xf32, #tpu.memory_space<vmem>>, vector<8x8x128xf32>
    %262 = vector.shape_cast %261 : vector<8x8x128xf32> to vector<64x128xf32>
    %263 = arith.truncf %262 : vector<64x128xf32> to vector<64x128xbf16>
    %c0_80 = arith.constant 0 : index
    %c0_81 = arith.constant 0 : index
    %264 = vector.load %arg6[%c0_80, %c0_81] : memref<128x384xbf16, #tpu.memory_space<vmem>>, vector<128x384xbf16>
    %cst_82 = arith.constant dense<0.000000e+00> : vector<64x384xf32>
    %265 = tpu.matmul %263, %264, %cst_82 {dimension_numbers = #tpu.dot_dimension_numbers<[1], [0], [0], [1], [0, 0, 1, 1], [], []>} : vector<64x128xbf16>, vector<128x384xbf16>, vector<64x384xf32> -> vector<64x384xf32>
    %c0_83 = arith.constant 0 : index
    %c0_84 = arith.constant 0 : index
    %266 = vector.load %arg8[%c0_83, %c0_84] : memref<1x384xf32, #tpu.memory_space<vmem>>, vector<1x384xf32>
    %267 = vector.broadcast %266 : vector<1x384xf32> to vector<64x384xf32>
    %268 = arith.addf %265, %267 : vector<64x384xf32>
    %269 = vector.shape_cast %268 : vector<64x384xf32> to vector<8x8x384xf32>
    %c0_85 = arith.constant 0 : index
    %c0_86 = arith.constant 0 : index
    %c0_87 = arith.constant 0 : index
    %270 = vector.load %arg11[%c0_85, %c0_86, %c0_87] : memref<8x8x384xf32, #tpu.memory_space<vmem>>, vector<8x8x384xf32>
    tpu.vector_store %arg11[%c0_85, %c0_86, %c0_87], %269 {strides = array<i32>} : memref<8x8x384xf32, #tpu.memory_space<vmem>>, vector<8x8x384xf32>,
    %c0_88 = arith.constant 0 : index
    %c0_89 = arith.constant 0 : index
    %271 = vector.load %arg7[%c0_88, %c0_89] : memref<128x384xbf16, #tpu.memory_space<vmem>>, vector<128x384xbf16>
    %c0_90 = arith.constant 0 : index
    %c0_91 = arith.constant 0 : index
    %272 = vector.load %arg9[%c0_90, %c0_91] : memref<1x128xf32, #tpu.memory_space<vmem>>, vector<1x128xf32>
    %273 = vector.shape_cast %272 : vector<1x128xf32> to vector<1x128xf32>
    %274 = vector.broadcast %273 : vector<1x128xf32> to vector<8x128xf32>
    %c0_i32_92 = arith.constant 0 : i32
    %275 = arith.index_cast %c0_i32_92 : i32 to index
    %c0_93 = arith.constant 0 : index
    %c0_94 = arith.constant 0 : index
    %276 = vector.load %arg11[%275, %c0_93, %c0_94] : memref<8x8x384xf32, #tpu.memory_space<vmem>>, vector<1x8x384xf32>
    %277 = vector.shape_cast %276 : vector<1x8x384xf32> to vector<8x384xf32>
    %278 = arith.truncf %0 : vector<8x128xf32> to vector<8x128xbf16>
    %cst_95 = arith.constant dense<0.000000e+00> : vector<8x384xf32>
    %279 = tpu.matmul %278, %271, %cst_95 {dimension_numbers = #tpu.dot_dimension_numbers<[1], [0], [0], [1], [0, 0, 1, 1], [], []>} : vector<8x128xbf16>, vector<128x384xbf16>, vector<8x384xf32> -> vector<8x384xf32>
    %280 = vector.extract_strided_slice %277 {offsets = [0, 0], sizes = [8, 256], strides = [1, 1]} : vector<8x384xf32> to vector<8x256xf32>
    %281 = vector.extract_strided_slice %279 {offsets = [0, 0], sizes = [8, 256], strides = [1, 1]} : vector<8x384xf32> to vector<8x256xf32>
    %282 = arith.addf %280, %281 : vector<8x256xf32>
    %cst_96 = arith.constant 0.000000e+00 : f32
    %283 = vector.broadcast %cst_96 : f32 to vector<8x256xf32>
    %284 = arith.subf %283, %282 : vector<8x256xf32>
    %285 = math.exp %284 : vector<8x256xf32>
    %cst_97 = arith.constant 1.000000e+00 : f32
    %286 = vector.broadcast %cst_97 : f32 to vector<8x256xf32>
    %287 = arith.addf %286, %285 : vector<8x256xf32>
    %288 = tpu.reciprocal %287 {approx = true} : vector<8x256xf32> -> vector<8x256xf32>
    %289 = vector.extract_strided_slice %288 {offsets = [0, 0], sizes = [8, 128], strides = [1, 1]} : vector<8x256xf32> to vector<8x128xf32>
    %290 = vector.extract_strided_slice %288 {offsets = [0, 128], sizes = [8, 128], strides = [1, 1]} : vector<8x256xf32> to vector<8x128xf32>
    %291 = vector.extract_strided_slice %277 {offsets = [0, 256], sizes = [8, 128], strides = [1, 1]} : vector<8x384xf32> to vector<8x128xf32>
    %292 = vector.extract_strided_slice %279 {offsets = [0, 256], sizes = [8, 128], strides = [1, 1]} : vector<8x384xf32> to vector<8x128xf32>
    %293 = arith.addf %292, %274 : vector<8x128xf32>
    %294 = arith.mulf %289, %293 : vector<8x128xf32>
    %295 = arith.addf %291, %294 : vector<8x128xf32>
    %296 = math.tanh %295 : vector<8x128xf32>
    %cst_98 = arith.constant 1.000000e+00 : f32
    %297 = vector.broadcast %cst_98 : f32 to vector<8x128xf32>
    %298 = arith.subf %297, %290 : vector<8x128xf32>
    %299 = arith.mulf %298, %296 : vector<8x128xf32>
    %300 = arith.mulf %290, %0 : vector<8x128xf32>
    %301 = arith.addf %299, %300 : vector<8x128xf32>
    %c1_i32_99 = arith.constant 1 : i32
    %302 = arith.index_cast %c1_i32_99 : i32 to index
    %c0_100 = arith.constant 0 : index
    %c0_101 = arith.constant 0 : index
    %303 = vector.load %arg11[%302, %c0_100, %c0_101] : memref<8x8x384xf32, #tpu.memory_space<vmem>>, vector<1x8x384xf32>
    %304 = vector.shape_cast %303 : vector<1x8x384xf32> to vector<8x384xf32>
    %305 = arith.truncf %301 : vector<8x128xf32> to vector<8x128xbf16>
    %cst_102 = arith.constant dense<0.000000e+00> : vector<8x384xf32>
    %306 = tpu.matmul %305, %271, %cst_102 {dimension_numbers = #tpu.dot_dimension_numbers<[1], [0], [0], [1], [0, 0, 1, 1], [], []>} : vector<8x128xbf16>, vector<128x384xbf16>, vector<8x384xf32> -> vector<8x384xf32>
    %307 = vector.extract_strided_slice %304 {offsets = [0, 0], sizes = [8, 256], strides = [1, 1]} : vector<8x384xf32> to vector<8x256xf32>
    %308 = vector.extract_strided_slice %306 {offsets = [0, 0], sizes = [8, 256], strides = [1, 1]} : vector<8x384xf32> to vector<8x256xf32>
    %309 = arith.addf %307, %308 : vector<8x256xf32>
    %cst_103 = arith.constant 0.000000e+00 : f32
    %310 = vector.broadcast %cst_103 : f32 to vector<8x256xf32>
    %311 = arith.subf %310, %309 : vector<8x256xf32>
    %312 = math.exp %311 : vector<8x256xf32>
    %cst_104 = arith.constant 1.000000e+00 : f32
    %313 = vector.broadcast %cst_104 : f32 to vector<8x256xf32>
    %314 = arith.addf %313, %312 : vector<8x256xf32>
    %315 = tpu.reciprocal %314 {approx = true} : vector<8x256xf32> -> vector<8x256xf32>
    %316 = vector.extract_strided_slice %315 {offsets = [0, 0], sizes = [8, 128], strides = [1, 1]} : vector<8x256xf32> to vector<8x128xf32>
    %317 = vector.extract_strided_slice %315 {offsets = [0, 128], sizes = [8, 128], strides = [1, 1]} : vector<8x256xf32> to vector<8x128xf32>
    %318 = vector.extract_strided_slice %304 {offsets = [0, 256], sizes = [8, 128], strides = [1, 1]} : vector<8x384xf32> to vector<8x128xf32>
    %319 = vector.extract_strided_slice %306 {offsets = [0, 256], sizes = [8, 128], strides = [1, 1]} : vector<8x384xf32> to vector<8x128xf32>
    %320 = arith.addf %319, %274 : vector<8x128xf32>
    %321 = arith.mulf %316, %320 : vector<8x128xf32>
    %322 = arith.addf %318, %321 : vector<8x128xf32>
    %323 = math.tanh %322 : vector<8x128xf32>
    %cst_105 = arith.constant 1.000000e+00 : f32
    %324 = vector.broadcast %cst_105 : f32 to vector<8x128xf32>
    %325 = arith.subf %324, %317 : vector<8x128xf32>
    %326 = arith.mulf %325, %323 : vector<8x128xf32>
    %327 = arith.mulf %317, %301 : vector<8x128xf32>
    %328 = arith.addf %326, %327 : vector<8x128xf32>
    %c2_i32_106 = arith.constant 2 : i32
    %329 = arith.index_cast %c2_i32_106 : i32 to index
    %c0_107 = arith.constant 0 : index
    %c0_108 = arith.constant 0 : index
    %330 = vector.load %arg11[%329, %c0_107, %c0_108] : memref<8x8x384xf32, #tpu.memory_space<vmem>>, vector<1x8x384xf32>
    %331 = vector.shape_cast %330 : vector<1x8x384xf32> to vector<8x384xf32>
    %332 = arith.truncf %328 : vector<8x128xf32> to vector<8x128xbf16>
    %cst_109 = arith.constant dense<0.000000e+00> : vector<8x384xf32>
    %333 = tpu.matmul %332, %271, %cst_109 {dimension_numbers = #tpu.dot_dimension_numbers<[1], [0], [0], [1], [0, 0, 1, 1], [], []>} : vector<8x128xbf16>, vector<128x384xbf16>, vector<8x384xf32> -> vector<8x384xf32>
    %334 = vector.extract_strided_slice %331 {offsets = [0, 0], sizes = [8, 256], strides = [1, 1]} : vector<8x384xf32> to vector<8x256xf32>
    %335 = vector.extract_strided_slice %333 {offsets = [0, 0], sizes = [8, 256], strides = [1, 1]} : vector<8x384xf32> to vector<8x256xf32>
    %336 = arith.addf %334, %335 : vector<8x256xf32>
    %cst_110 = arith.constant 0.000000e+00 : f32
    %337 = vector.broadcast %cst_110 : f32 to vector<8x256xf32>
    %338 = arith.subf %337, %336 : vector<8x256xf32>
    %339 = math.exp %338 : vector<8x256xf32>
    %cst_111 = arith.constant 1.000000e+00 : f32
    %340 = vector.broadcast %cst_111 : f32 to vector<8x256xf32>
    %341 = arith.addf %340, %339 : vector<8x256xf32>
    %342 = tpu.reciprocal %341 {approx = true} : vector<8x256xf32> -> vector<8x256xf32>
    %343 = vector.extract_strided_slice %342 {offsets = [0, 0], sizes = [8, 128], strides = [1, 1]} : vector<8x256xf32> to vector<8x128xf32>
    %344 = vector.extract_strided_slice %342 {offsets = [0, 128], sizes = [8, 128], strides = [1, 1]} : vector<8x256xf32> to vector<8x128xf32>
    %345 = vector.extract_strided_slice %331 {offsets = [0, 256], sizes = [8, 128], strides = [1, 1]} : vector<8x384xf32> to vector<8x128xf32>
    %346 = vector.extract_strided_slice %333 {offsets = [0, 256], sizes = [8, 128], strides = [1, 1]} : vector<8x384xf32> to vector<8x128xf32>
    %347 = arith.addf %346, %274 : vector<8x128xf32>
    %348 = arith.mulf %343, %347 : vector<8x128xf32>
    %349 = arith.addf %345, %348 : vector<8x128xf32>
    %350 = math.tanh %349 : vector<8x128xf32>
    %cst_112 = arith.constant 1.000000e+00 : f32
    %351 = vector.broadcast %cst_112 : f32 to vector<8x128xf32>
    %352 = arith.subf %351, %344 : vector<8x128xf32>
    %353 = arith.mulf %352, %350 : vector<8x128xf32>
    %354 = arith.mulf %344, %328 : vector<8x128xf32>
    %355 = arith.addf %353, %354 : vector<8x128xf32>
    %c3_i32_113 = arith.constant 3 : i32
    %356 = arith.index_cast %c3_i32_113 : i32 to index
    %c0_114 = arith.constant 0 : index
    %c0_115 = arith.constant 0 : index
    %357 = vector.load %arg11[%356, %c0_114, %c0_115] : memref<8x8x384xf32, #tpu.memory_space<vmem>>, vector<1x8x384xf32>
    %358 = vector.shape_cast %357 : vector<1x8x384xf32> to vector<8x384xf32>
    %359 = arith.truncf %355 : vector<8x128xf32> to vector<8x128xbf16>
    %cst_116 = arith.constant dense<0.000000e+00> : vector<8x384xf32>
    %360 = tpu.matmul %359, %271, %cst_116 {dimension_numbers = #tpu.dot_dimension_numbers<[1], [0], [0], [1], [0, 0, 1, 1], [], []>} : vector<8x128xbf16>, vector<128x384xbf16>, vector<8x384xf32> -> vector<8x384xf32>
    %361 = vector.extract_strided_slice %358 {offsets = [0, 0], sizes = [8, 256], strides = [1, 1]} : vector<8x384xf32> to vector<8x256xf32>
    %362 = vector.extract_strided_slice %360 {offsets = [0, 0], sizes = [8, 256], strides = [1, 1]} : vector<8x384xf32> to vector<8x256xf32>
    %363 = arith.addf %361, %362 : vector<8x256xf32>
    %cst_117 = arith.constant 0.000000e+00 : f32
    %364 = vector.broadcast %cst_117 : f32 to vector<8x256xf32>
    %365 = arith.subf %364, %363 : vector<8x256xf32>
    %366 = math.exp %365 : vector<8x256xf32>
    %cst_118 = arith.constant 1.000000e+00 : f32
    %367 = vector.broadcast %cst_118 : f32 to vector<8x256xf32>
    %368 = arith.addf %367, %366 : vector<8x256xf32>
    %369 = tpu.reciprocal %368 {approx = true} : vector<8x256xf32> -> vector<8x256xf32>
    %370 = vector.extract_strided_slice %369 {offsets = [0, 0], sizes = [8, 128], strides = [1, 1]} : vector<8x256xf32> to vector<8x128xf32>
    %371 = vector.extract_strided_slice %369 {offsets = [0, 128], sizes = [8, 128], strides = [1, 1]} : vector<8x256xf32> to vector<8x128xf32>
    %372 = vector.extract_strided_slice %358 {offsets = [0, 256], sizes = [8, 128], strides = [1, 1]} : vector<8x384xf32> to vector<8x128xf32>
    %373 = vector.extract_strided_slice %360 {offsets = [0, 256], sizes = [8, 128], strides = [1, 1]} : vector<8x384xf32> to vector<8x128xf32>
    %374 = arith.addf %373, %274 : vector<8x128xf32>
    %375 = arith.mulf %370, %374 : vector<8x128xf32>
    %376 = arith.addf %372, %375 : vector<8x128xf32>
    %377 = math.tanh %376 : vector<8x128xf32>
    %cst_119 = arith.constant 1.000000e+00 : f32
    %378 = vector.broadcast %cst_119 : f32 to vector<8x128xf32>
    %379 = arith.subf %378, %371 : vector<8x128xf32>
    %380 = arith.mulf %379, %377 : vector<8x128xf32>
    %381 = arith.mulf %371, %355 : vector<8x128xf32>
    %382 = arith.addf %380, %381 : vector<8x128xf32>
    %c4_i32_120 = arith.constant 4 : i32
    %383 = arith.index_cast %c4_i32_120 : i32 to index
    %c0_121 = arith.constant 0 : index
    %c0_122 = arith.constant 0 : index
    %384 = vector.load %arg11[%383, %c0_121, %c0_122] : memref<8x8x384xf32, #tpu.memory_space<vmem>>, vector<1x8x384xf32>
    %385 = vector.shape_cast %384 : vector<1x8x384xf32> to vector<8x384xf32>
    %386 = arith.truncf %382 : vector<8x128xf32> to vector<8x128xbf16>
    %cst_123 = arith.constant dense<0.000000e+00> : vector<8x384xf32>
    %387 = tpu.matmul %386, %271, %cst_123 {dimension_numbers = #tpu.dot_dimension_numbers<[1], [0], [0], [1], [0, 0, 1, 1], [], []>} : vector<8x128xbf16>, vector<128x384xbf16>, vector<8x384xf32> -> vector<8x384xf32>
    %388 = vector.extract_strided_slice %385 {offsets = [0, 0], sizes = [8, 256], strides = [1, 1]} : vector<8x384xf32> to vector<8x256xf32>
    %389 = vector.extract_strided_slice %387 {offsets = [0, 0], sizes = [8, 256], strides = [1, 1]} : vector<8x384xf32> to vector<8x256xf32>
    %390 = arith.addf %388, %389 : vector<8x256xf32>
    %cst_124 = arith.constant 0.000000e+00 : f32
    %391 = vector.broadcast %cst_124 : f32 to vector<8x256xf32>
    %392 = arith.subf %391, %390 : vector<8x256xf32>
    %393 = math.exp %392 : vector<8x256xf32>
    %cst_125 = arith.constant 1.000000e+00 : f32
    %394 = vector.broadcast %cst_125 : f32 to vector<8x256xf32>
    %395 = arith.addf %394, %393 : vector<8x256xf32>
    %396 = tpu.reciprocal %395 {approx = true} : vector<8x256xf32> -> vector<8x256xf32>
    %397 = vector.extract_strided_slice %396 {offsets = [0, 0], sizes = [8, 128], strides = [1, 1]} : vector<8x256xf32> to vector<8x128xf32>
    %398 = vector.extract_strided_slice %396 {offsets = [0, 128], sizes = [8, 128], strides = [1, 1]} : vector<8x256xf32> to vector<8x128xf32>
    %399 = vector.extract_strided_slice %385 {offsets = [0, 256], sizes = [8, 128], strides = [1, 1]} : vector<8x384xf32> to vector<8x128xf32>
    %400 = vector.extract_strided_slice %387 {offsets = [0, 256], sizes = [8, 128], strides = [1, 1]} : vector<8x384xf32> to vector<8x128xf32>
    %401 = arith.addf %400, %274 : vector<8x128xf32>
    %402 = arith.mulf %397, %401 : vector<8x128xf32>
    %403 = arith.addf %399, %402 : vector<8x128xf32>
    %404 = math.tanh %403 : vector<8x128xf32>
    %cst_126 = arith.constant 1.000000e+00 : f32
    %405 = vector.broadcast %cst_126 : f32 to vector<8x128xf32>
    %406 = arith.subf %405, %398 : vector<8x128xf32>
    %407 = arith.mulf %406, %404 : vector<8x128xf32>
    %408 = arith.mulf %398, %382 : vector<8x128xf32>
    %409 = arith.addf %407, %408 : vector<8x128xf32>
    %c5_i32_127 = arith.constant 5 : i32
    %410 = arith.index_cast %c5_i32_127 : i32 to index
    %c0_128 = arith.constant 0 : index
    %c0_129 = arith.constant 0 : index
    %411 = vector.load %arg11[%410, %c0_128, %c0_129] : memref<8x8x384xf32, #tpu.memory_space<vmem>>, vector<1x8x384xf32>
    %412 = vector.shape_cast %411 : vector<1x8x384xf32> to vector<8x384xf32>
    %413 = arith.truncf %409 : vector<8x128xf32> to vector<8x128xbf16>
    %cst_130 = arith.constant dense<0.000000e+00> : vector<8x384xf32>
    %414 = tpu.matmul %413, %271, %cst_130 {dimension_numbers = #tpu.dot_dimension_numbers<[1], [0], [0], [1], [0, 0, 1, 1], [], []>} : vector<8x128xbf16>, vector<128x384xbf16>, vector<8x384xf32> -> vector<8x384xf32>
    %415 = vector.extract_strided_slice %412 {offsets = [0, 0], sizes = [8, 256], strides = [1, 1]} : vector<8x384xf32> to vector<8x256xf32>
    %416 = vector.extract_strided_slice %414 {offsets = [0, 0], sizes = [8, 256], strides = [1, 1]} : vector<8x384xf32> to vector<8x256xf32>
    %417 = arith.addf %415, %416 : vector<8x256xf32>
    %cst_131 = arith.constant 0.000000e+00 : f32
    %418 = vector.broadcast %cst_131 : f32 to vector<8x256xf32>
    %419 = arith.subf %418, %417 : vector<8x256xf32>
    %420 = math.exp %419 : vector<8x256xf32>
    %cst_132 = arith.constant 1.000000e+00 : f32
    %421 = vector.broadcast %cst_132 : f32 to vector<8x256xf32>
    %422 = arith.addf %421, %420 : vector<8x256xf32>
    %423 = tpu.reciprocal %422 {approx = true} : vector<8x256xf32> -> vector<8x256xf32>
    %424 = vector.extract_strided_slice %423 {offsets = [0, 0], sizes = [8, 128], strides = [1, 1]} : vector<8x256xf32> to vector<8x128xf32>
    %425 = vector.extract_strided_slice %423 {offsets = [0, 128], sizes = [8, 128], strides = [1, 1]} : vector<8x256xf32> to vector<8x128xf32>
    %426 = vector.extract_strided_slice %412 {offsets = [0, 256], sizes = [8, 128], strides = [1, 1]} : vector<8x384xf32> to vector<8x128xf32>
    %427 = vector.extract_strided_slice %414 {offsets = [0, 256], sizes = [8, 128], strides = [1, 1]} : vector<8x384xf32> to vector<8x128xf32>
    %428 = arith.addf %427, %274 : vector<8x128xf32>
    %429 = arith.mulf %424, %428 : vector<8x128xf32>
    %430 = arith.addf %426, %429 : vector<8x128xf32>
    %431 = math.tanh %430 : vector<8x128xf32>
    %cst_133 = arith.constant 1.000000e+00 : f32
    %432 = vector.broadcast %cst_133 : f32 to vector<8x128xf32>
    %433 = arith.subf %432, %425 : vector<8x128xf32>
    %434 = arith.mulf %433, %431 : vector<8x128xf32>
    %435 = arith.mulf %425, %409 : vector<8x128xf32>
    %436 = arith.addf %434, %435 : vector<8x128xf32>
    %c6_i32_134 = arith.constant 6 : i32
    %437 = arith.index_cast %c6_i32_134 : i32 to index
    %c0_135 = arith.constant 0 : index
    %c0_136 = arith.constant 0 : index
    %438 = vector.load %arg11[%437, %c0_135, %c0_136] : memref<8x8x384xf32, #tpu.memory_space<vmem>>, vector<1x8x384xf32>
    %439 = vector.shape_cast %438 : vector<1x8x384xf32> to vector<8x384xf32>
    %440 = arith.truncf %436 : vector<8x128xf32> to vector<8x128xbf16>
    %cst_137 = arith.constant dense<0.000000e+00> : vector<8x384xf32>
    %441 = tpu.matmul %440, %271, %cst_137 {dimension_numbers = #tpu.dot_dimension_numbers<[1], [0], [0], [1], [0, 0, 1, 1], [], []>} : vector<8x128xbf16>, vector<128x384xbf16>, vector<8x384xf32> -> vector<8x384xf32>
    %442 = vector.extract_strided_slice %439 {offsets = [0, 0], sizes = [8, 256], strides = [1, 1]} : vector<8x384xf32> to vector<8x256xf32>
    %443 = vector.extract_strided_slice %441 {offsets = [0, 0], sizes = [8, 256], strides = [1, 1]} : vector<8x384xf32> to vector<8x256xf32>
    %444 = arith.addf %442, %443 : vector<8x256xf32>
    %cst_138 = arith.constant 0.000000e+00 : f32
    %445 = vector.broadcast %cst_138 : f32 to vector<8x256xf32>
    %446 = arith.subf %445, %444 : vector<8x256xf32>
    %447 = math.exp %446 : vector<8x256xf32>
    %cst_139 = arith.constant 1.000000e+00 : f32
    %448 = vector.broadcast %cst_139 : f32 to vector<8x256xf32>
    %449 = arith.addf %448, %447 : vector<8x256xf32>
    %450 = tpu.reciprocal %449 {approx = true} : vector<8x256xf32> -> vector<8x256xf32>
    %451 = vector.extract_strided_slice %450 {offsets = [0, 0], sizes = [8, 128], strides = [1, 1]} : vector<8x256xf32> to vector<8x128xf32>
    %452 = vector.extract_strided_slice %450 {offsets = [0, 128], sizes = [8, 128], strides = [1, 1]} : vector<8x256xf32> to vector<8x128xf32>
    %453 = vector.extract_strided_slice %439 {offsets = [0, 256], sizes = [8, 128], strides = [1, 1]} : vector<8x384xf32> to vector<8x128xf32>
    %454 = vector.extract_strided_slice %441 {offsets = [0, 256], sizes = [8, 128], strides = [1, 1]} : vector<8x384xf32> to vector<8x128xf32>
    %455 = arith.addf %454, %274 : vector<8x128xf32>
    %456 = arith.mulf %451, %455 : vector<8x128xf32>
    %457 = arith.addf %453, %456 : vector<8x128xf32>
    %458 = math.tanh %457 : vector<8x128xf32>
    %cst_140 = arith.constant 1.000000e+00 : f32
    %459 = vector.broadcast %cst_140 : f32 to vector<8x128xf32>
    %460 = arith.subf %459, %452 : vector<8x128xf32>
    %461 = arith.mulf %460, %458 : vector<8x128xf32>
    %462 = arith.mulf %452, %436 : vector<8x128xf32>
    %463 = arith.addf %461, %462 : vector<8x128xf32>
    %c7_i32_141 = arith.constant 7 : i32
    %464 = arith.index_cast %c7_i32_141 : i32 to index
    %c0_142 = arith.constant 0 : index
    %c0_143 = arith.constant 0 : index
    %465 = vector.load %arg11[%464, %c0_142, %c0_143] : memref<8x8x384xf32, #tpu.memory_space<vmem>>, vector<1x8x384xf32>
    %466 = vector.shape_cast %465 : vector<1x8x384xf32> to vector<8x384xf32>
    %467 = arith.truncf %463 : vector<8x128xf32> to vector<8x128xbf16>
    %cst_144 = arith.constant dense<0.000000e+00> : vector<8x384xf32>
    %468 = tpu.matmul %467, %271, %cst_144 {dimension_numbers = #tpu.dot_dimension_numbers<[1], [0], [0], [1], [0, 0, 1, 1], [], []>} : vector<8x128xbf16>, vector<128x384xbf16>, vector<8x384xf32> -> vector<8x384xf32>
    %469 = vector.extract_strided_slice %466 {offsets = [0, 0], sizes = [8, 256], strides = [1, 1]} : vector<8x384xf32> to vector<8x256xf32>
    %470 = vector.extract_strided_slice %468 {offsets = [0, 0], sizes = [8, 256], strides = [1, 1]} : vector<8x384xf32> to vector<8x256xf32>
    %471 = arith.addf %469, %470 : vector<8x256xf32>
    %cst_145 = arith.constant 0.000000e+00 : f32
    %472 = vector.broadcast %cst_145 : f32 to vector<8x256xf32>
    %473 = arith.subf %472, %471 : vector<8x256xf32>
    %474 = math.exp %473 : vector<8x256xf32>
    %cst_146 = arith.constant 1.000000e+00 : f32
    %475 = vector.broadcast %cst_146 : f32 to vector<8x256xf32>
    %476 = arith.addf %475, %474 : vector<8x256xf32>
    %477 = tpu.reciprocal %476 {approx = true} : vector<8x256xf32> -> vector<8x256xf32>
    %478 = vector.extract_strided_slice %477 {offsets = [0, 0], sizes = [8, 128], strides = [1, 1]} : vector<8x256xf32> to vector<8x128xf32>
    %479 = vector.extract_strided_slice %477 {offsets = [0, 128], sizes = [8, 128], strides = [1, 1]} : vector<8x256xf32> to vector<8x128xf32>
    %480 = vector.extract_strided_slice %466 {offsets = [0, 256], sizes = [8, 128], strides = [1, 1]} : vector<8x384xf32> to vector<8x128xf32>
    %481 = vector.extract_strided_slice %468 {offsets = [0, 256], sizes = [8, 128], strides = [1, 1]} : vector<8x384xf32> to vector<8x128xf32>
    %482 = arith.addf %481, %274 : vector<8x128xf32>
    %483 = arith.mulf %478, %482 : vector<8x128xf32>
    %484 = arith.addf %480, %483 : vector<8x128xf32>
    %485 = math.tanh %484 : vector<8x128xf32>
    %cst_147 = arith.constant 1.000000e+00 : f32
    %486 = vector.broadcast %cst_147 : f32 to vector<8x128xf32>
    %487 = arith.subf %486, %479 : vector<8x128xf32>
    %488 = arith.mulf %487, %485 : vector<8x128xf32>
    %489 = arith.mulf %479, %463 : vector<8x128xf32>
    %490 = arith.addf %488, %489 : vector<8x128xf32>
    %c8_i32_148 = arith.constant 8 : i32
    %c0_149 = arith.constant 0 : index
    %c0_150 = arith.constant 0 : index
    %491 = vector.load %arg10[%c0_149, %c0_150] : memref<8x128xf32, #tpu.memory_space<vmem>>, vector<8x128xf32>
    tpu.vector_store %arg10[%c0_149, %c0_150], %490 {strides = array<i32>} : memref<8x128xf32, #tpu.memory_space<vmem>>, vector<8x128xf32>,
    return
  }
  func.func @transform_0(%arg0: i32) -> (i32, i32) {
    %c0_i32 = arith.constant 0 : i32
    %c0_i32_0 = arith.constant 0 : i32
    %c0_i32_1 = arith.constant 0 : i32
    return %c0_i32, %c0_i32_0 : i32, i32
  }
  func.func @transform_1(%arg0: i32) -> (i32, i32) {
    %c0_i32 = arith.constant 0 : i32
    %c0_i32_0 = arith.constant 0 : i32
    %c0_i32_1 = arith.constant 0 : i32
    return %c0_i32, %c0_i32_0 : i32, i32
  }
  func.func @transform_2(%arg0: i32) -> (i32, i32) {
    %c0_i32 = arith.constant 0 : i32
    %c0_i32_0 = arith.constant 0 : i32
    %c0_i32_1 = arith.constant 0 : i32
    return %c0_i32, %c0_i32_0 : i32, i32
  }
  func.func @transform_3(%arg0: i32) -> (i32, i32) {
    %c0_i32 = arith.constant 0 : i32
    %c0_i32_0 = arith.constant 0 : i32
    %c0_i32_1 = arith.constant 0 : i32
    return %c0_i32, %c0_i32_0 : i32, i32
  }
  func.func @transform_4(%arg0: i32) -> (i32, i32) {
    %c0_i32 = arith.constant 0 : i32
    %c0_i32_0 = arith.constant 0 : i32
    %c0_i32_1 = arith.constant 0 : i32
    return %c0_i32, %c0_i32_0 : i32, i32
  }
  func.func @transform_5(%arg0: i32) -> (i32, i32) {
    %c0_i32 = arith.constant 0 : i32
    %c0_i32_0 = arith.constant 0 : i32
    %c0_i32_1 = arith.constant 0 : i32
    return %c0_i32, %c0_i32_0 : i32, i32
  }
  func.func @transform_6(%arg0: i32) -> (i32, i32) {
    %c0_i32 = arith.constant 0 : i32
    %c0_i32_0 = arith.constant 0 : i32
    %c0_i32_1 = arith.constant 0 : i32
    return %c0_i32, %c0_i32_0 : i32, i32
  }
  func.func @transform_7(%arg0: i32) -> (i32, i32) {
    %c0_i32 = arith.constant 0 : i32
    %c0_i32_0 = arith.constant 0 : i32
    %c0_i32_1 = arith.constant 0 : i32
    return %c0_i32, %c0_i32_0 : i32, i32
  }
  func.func @transform_8(%arg0: i32) -> (i32, i32) {
    %c0_i32 = arith.constant 0 : i32
    %c0_i32_0 = arith.constant 0 : i32
    %c0_i32_1 = arith.constant 0 : i32
    return %c0_i32, %c0_i32_0 : i32, i32
  }
  func.func @transform_9(%arg0: i32) -> (i32, i32) {
    %c0_i32 = arith.constant 0 : i32
    %c0_i32_0 = arith.constant 0 : i32
    %c0_i32_1 = arith.constant 0 : i32
    return %c0_i32, %c0_i32_0 : i32, i32
  }
}

</mosaic_0001>

<llo_original>
// kernel: gru_forward.1
$region0: #{gru_forward.1}
  #allocation0 [shape = 'u32[]', space=smem, size = 0x4, offset = 0x4, fixed_abs, tag = 'smem constant byte address 0x4 - core index']
  #allocation1 [shape = 'u32[72,128]{1,0:T(1,128)}', space=vmem, size = 0x9000, scoped, tag = 'internal scratch']
  #allocation2 [shape = 'f32[8,8,384]{2,1,0:T(8,128)}', space=vmem, size = 0x18000, scoped, tag = 'scratch operand']
  #allocation3 [shape = 'f32[8,8,128]{2,1,0:T(8,128)}', space=vmem, size = 0x8000, scoped, tag = 'scratch operand']
  %s0 = inlined_call_operand.vmem [shape: bf16[64,128], index: 0, kind: input, shape index: {}]
  %s1 = inlined_call_operand.hbm [shape: bf16[128,384], index: 1, kind: input, shape index: {}]
  %s2 = inlined_call_operand.hbm [shape: bf16[128,384], index: 2, kind: input, shape index: {}]
  %s3 = inlined_call_operand.vmem [shape: f32[1,384], index: 3, kind: input, shape index: {}]
  %s4 = inlined_call_operand.vmem [shape: f32[1,128], index: 4, kind: input, shape index: {}]
  %s5 = inlined_call_operand.hbm [shape: bf16[128,384], index: 5, kind: input, shape index: {}]
  %s6 = inlined_call_operand.hbm [shape: bf16[128,384], index: 6, kind: input, shape index: {}]
  %s7 = inlined_call_operand.vmem [shape: f32[1,384], index: 7, kind: input, shape index: {}]
  %s8 = inlined_call_operand.vmem [shape: f32[1,128], index: 8, kind: input, shape index: {}]
  %s9 = inlined_call_operand.vmem [shape: f32[8,128], index: 9, kind: output, shape index: {}]
  %s10 = sld [smem:[#allocation0]]
  $region62: #{gru_forward.1} parent=0
    _
  %s12 = ssub.s32 1, %s10
  %s13 = scalar_select 0, %s12, %s10
  $region1: #{gru_forward.1} parent=0
    #allocation4 [shape = 'u8[98304]{0}', space=vmem, size = 0x18000, scoped, tag = 'input window, operand 1, single buffered']
    #allocation5 [shape = 's32[1]{0}', space=sflag, size = 0x4, scoped, tag = 'scoped memory for gru_forward.1']
    #allocation6 [shape = 'u8[98304]{0}', space=vmem, size = 0x18000, scoped, tag = 'input window, operand 2, single buffered']
    #allocation7 [shape = 's32[1]{0}', space=sflag, size = 0x4, scoped, tag = 'scoped memory for gru_forward.1']
    #allocation8 [shape = 'u8[98304]{0}', space=vmem, size = 0x18000, scoped, tag = 'input window, operand 5, single buffered']
    #allocation9 [shape = 'u8[98304]{0}', space=vmem, size = 0x18000, scoped, tag = 'input window, operand 6, single buffered']
    #allocation10 [shape = 's32[1]{0}', space=sflag, size = 0x4, scoped, tag = 'scoped memory for gru_forward.1']
    %14 = vsyncpa [#allocation5], 0
    %15 = vsyncpa [#allocation7], 0
    %16 = vsyncpa [#allocation10], 0
    // Predicated region
    $region2: #{gru_forward.1} parent=1 // pred_check
      _
    $region3: #{gru_forward.1} parent=1 // pred_check_branch
      %18 = sbr.rel (0) target = $region5
    $region4: #{gru_forward.1} parent=1 // pred_region
      _
    $region5: #{gru_forward.1} parent=1 // pred_fallthru
      _
    // Predicated region
    $region6: #{gru_forward.1} parent=1 // pred_check
      _
    $region7: #{gru_forward.1} parent=1 // pred_check_branch
      %20 = sbr.rel (0) target = $region9
    $region8: #{gru_forward.1} parent=1 // pred_region
      %22 = vsyncadd [#allocation5], 0
      %s23 = sshll.u32 %s1, 4
      %s24 = int_to_ptr.hbm [resolvable:$true] %s23
      %s25 = sshll.u32 [#allocation4], 4
      %s26 = int_to_ptr.vmem [resolvable:$true] %s25
      %31 = dma.hbm_to_vmem [thread:$0]  %s24, 3072, %s26, [#allocation5], 192, 192, 12
    $region9: #{gru_forward.1} parent=1 // pred_fallthru
      _
    // Predicated region
    $region10: #{gru_forward.1} parent=1 // pred_check
      _
    $region11: #{gru_forward.1} parent=1 // pred_check_branch
      %33 = sbr.rel (0) target = $region13
    $region12: #{gru_forward.1} parent=1 // pred_region
      %35 = vsyncadd [#allocation7], 0
      %s36 = sshll.u32 %s2, 4
      %s37 = int_to_ptr.hbm [resolvable:$true] %s36
      %s38 = sshll.u32 [#allocation6], 4
      %s39 = int_to_ptr.vmem [resolvable:$true] %s38
      %44 = dma.hbm_to_vmem [thread:$0]  %s37, 3072, %s39, [#allocation7], 192, 192, 12
    $region13: #{gru_forward.1} parent=1 // pred_fallthru
      _
    // Predicated region
    $region14: #{gru_forward.1} parent=1 // pred_check
      _
    $region15: #{gru_forward.1} parent=1 // pred_check_branch
      %46 = sbr.rel (0) target = $region17
    $region16: #{gru_forward.1} parent=1 // pred_region
      _
    $region17: #{gru_forward.1} parent=1 // pred_fallthru
      _
    // Predicated region
    $region18: #{gru_forward.1} parent=1 // pred_check
      _
    $region19: #{gru_forward.1} parent=1 // pred_check_branch
      %48 = sbr.rel (0) target = $region21
    $region20: #{gru_forward.1} parent=1 // pred_region
      _
    $region21: #{gru_forward.1} parent=1 // pred_fallthru
      _
    // Predicated region
    $region22: #{gru_forward.1} parent=1 // pred_check
      _
    $region23: #{gru_forward.1} parent=1 // pred_check_branch
      %50 = sbr.rel (0) target = $region25
    $region24: #{gru_forward.1} parent=1 // pred_region
      %52 = vsyncadd [#allocation7], 0
      %s53 = sshll.u32 %s5, 4
      %s54 = int_to_ptr.hbm [resolvable:$true] %s53
      %s55 = sshll.u32 [#allocation8], 4
      %s56 = int_to_ptr.vmem [resolvable:$true] %s55
      %61 = dma.hbm_to_vmem [thread:$0]  %s54, 3072, %s56, [#allocation7], 192, 192, 12
    $region25: #{gru_forward.1} parent=1 // pred_fallthru
      _
    // Predicated region
    $region26: #{gru_forward.1} parent=1 // pred_check
      _
    $region27: #{gru_forward.1} parent=1 // pred_check_branch
      %63 = sbr.rel (0) target = $region29
    $region28: #{gru_forward.1} parent=1 // pred_region
      %65 = vsyncadd [#allocation10], 0
      %s66 = sshll.u32 %s6, 4
      %s67 = int_to_ptr.hbm [resolvable:$true] %s66
      %s68 = sshll.u32 [#allocation9], 4
      %s69 = int_to_ptr.vmem [resolvable:$true] %s68
      %74 = dma.hbm_to_vmem [thread:$0]  %s67, 3072, %s69, [#allocation10], 192, 192, 12
    $region29: #{gru_forward.1} parent=1 // pred_fallthru
      _
    // Predicated region
    $region30: #{gru_forward.1} parent=1 // pred_check
      _
    $region31: #{gru_forward.1} parent=1 // pred_check_branch
      %76 = sbr.rel (0) target = $region33
    $region32: #{gru_forward.1} parent=1 // pred_region
      _
    $region33: #{gru_forward.1} parent=1 // pred_fallthru
      _
    // Predicated region
    $region34: #{gru_forward.1} parent=1 // pred_check
      _
    $region35: #{gru_forward.1} parent=1 // pred_check_branch
      %78 = sbr.rel (0) target = $region37
    $region36: #{gru_forward.1} parent=1 // pred_region
      _
    $region37: #{gru_forward.1} parent=1 // pred_fallthru
      _
    // Predicated region
    $region38: #{gru_forward.1} parent=1 // pred_check
      _
    $region39: #{gru_forward.1} parent=1 // pred_check_branch
      %80 = sbr.rel (0) target = $region41
    $region40: #{gru_forward.1} parent=1 // pred_region
      %82 = dma.done [#allocation5], 3072
    $region41: #{gru_forward.1} parent=1 // pred_fallthru
      _
    // Predicated region
    $region42: #{gru_forward.1} parent=1 // pred_check
      _
    $region43: #{gru_forward.1} parent=1 // pred_check_branch
      %84 = sbr.rel (0) target = $region45
    $region44: #{gru_forward.1} parent=1 // pred_region
      %86 = dma.done [#allocation7], 3072
    $region45: #{gru_forward.1} parent=1 // pred_fallthru
      _
    // Predicated region
    $region46: #{gru_forward.1} parent=1 // pred_check
      _
    $region47: #{gru_forward.1} parent=1 // pred_check_branch
      %88 = sbr.rel (0) target = $region49
    $region48: #{gru_forward.1} parent=1 // pred_region
      %90 = dma.done [#allocation7], 3072
    $region49: #{gru_forward.1} parent=1 // pred_fallthru
      _
    // Predicated region
    $region50: #{gru_forward.1} parent=1 // pred_check
      _
    $region51: #{gru_forward.1} parent=1 // pred_check_branch
      %92 = sbr.rel (0) target = $region53
    $region52: #{gru_forward.1} parent=1 // pred_region
      %94 = dma.done [#allocation10], 3072
    $region53: #{gru_forward.1} parent=1 // pred_fallthru
      _
    %v96 = vld [vmem:[%s0] sm:$0xf]
    %v97 = vld [vmem:[%s0 + $0x4] sm:$0xf]
    %v98 = vld [vmem:[%s0 + $0x8] sm:$0xf]
    %v99 = vld [vmem:[%s0 + $0xc] sm:$0xf]
    %v100 = vld [vmem:[%s0 + $0x10] sm:$0xf]
    %v101 = vld [vmem:[%s0 + $0x14] sm:$0xf]
    %v102 = vld [vmem:[%s0 + $0x18] sm:$0xf]
    %v103 = vld [vmem:[%s0 + $0x1c] sm:$0xf]
    %v104 = vld [vmem:[#allocation4] sm:$0xff]
    %v105 = vld [vmem:[#allocation4 + $0x8] sm:$0xf]
    %v106 = vld [vmem:[#allocation4 + $0xc] sm:$0xff]
    %v107 = vld [vmem:[#allocation4 + $0x14] sm:$0xf]
    %v108 = vld [vmem:[#allocation4 + $0x18] sm:$0xff]
    %v109 = vld [vmem:[#allocation4 + $0x20] sm:$0xf]
    %v110 = vld [vmem:[#allocation4 + $0x24] sm:$0xff]
    %v111 = vld [vmem:[#allocation4 + $0x2c] sm:$0xf]
    %v112 = vld [vmem:[#allocation4 + $0x30] sm:$0xff]
    %v113 = vld [vmem:[#allocation4 + $0x38] sm:$0xf]
    %v114 = vld [vmem:[#allocation4 + $0x3c] sm:$0xff]
    %v115 = vld [vmem:[#allocation4 + $0x44] sm:$0xf]
    %v116 = vld [vmem:[#allocation4 + $0x48] sm:$0xff]
    %v117 = vld [vmem:[#allocation4 + $0x50] sm:$0xf]
    %v118 = vld [vmem:[#allocation4 + $0x54] sm:$0xff]
    %v119 = vld [vmem:[#allocation4 + $0x5c] sm:$0xf]
    %v120 = vld [vmem:[#allocation4 + $0x60] sm:$0xff]
    %v121 = vld [vmem:[#allocation4 + $0x68] sm:$0xf]
    %v122 = vld [vmem:[#allocation4 + $0x6c] sm:$0xff]
    %v123 = vld [vmem:[#allocation4 + $0x74] sm:$0xf]
    %v124 = vld [vmem:[#allocation4 + $0x78] sm:$0xff]
    %v125 = vld [vmem:[#allocation4 + $0x80] sm:$0xf]
    %v126 = vld [vmem:[#allocation4 + $0x84] sm:$0xff]
    %v127 = vld [vmem:[#allocation4 + $0x8c] sm:$0xf]
    %v128 = vld [vmem:[#allocation4 + $0x90] sm:$0xff]
    %v129 = vld [vmem:[#allocation4 + $0x98] sm:$0xf]
    %v130 = vld [vmem:[#allocation4 + $0x9c] sm:$0xff]
    %v131 = vld [vmem:[#allocation4 + $0xa4] sm:$0xf]
    %v132 = vld [vmem:[#allocation4 + $0xa8] sm:$0xff]
    %v133 = vld [vmem:[#allocation4 + $0xb0] sm:$0xf]
    %v134 = vld [vmem:[#allocation4 + $0xb4] sm:$0xff]
    %v135 = vld [vmem:[#allocation4 + $0xbc] sm:$0xf]
    %v136 = vld [vmem:[%s3] sm:$0x7]
    %v138 = vperm.slane %v136, 0
    %v139 = vperm.slane %v136, 1
    %v140 = vperm.slane %v136, 2
    %v152 = vunpack.c.l.b16 %v96
    %v153 = vunpack.c.l.b16 %v97
    %v154 = vunpack.c.l.b16 %v98
    %v155 = vunpack.c.l.b16 %v99
    %v156 = vunpack.c.l.b16 %v100
    %v157 = vunpack.c.l.b16 %v101
    %v158 = vunpack.c.l.b16 %v102
    %v159 = vunpack.c.l.b16 %v103
    %v160 = vpack.c.b16 %v153, %v152
    %v161 = vpack.c.b16 %v155, %v154
    %v162 = vpack.c.b16 %v157, %v156
    %v163 = vpack.c.b16 %v159, %v158
    %v200 = vunpack.c.l.b16 %v104
    %v201 = vunpack.c.h.b16 %v104
    %v202 = vunpack.c.l.b16 %v105
    %v203 = vunpack.c.l.b16 %v106
    %v204 = vunpack.c.h.b16 %v106
    %v205 = vunpack.c.l.b16 %v107
    %v206 = vunpack.c.l.b16 %v108
    %v207 = vunpack.c.h.b16 %v108
    %v208 = vunpack.c.l.b16 %v109
    %v209 = vunpack.c.l.b16 %v110
    %v210 = vunpack.c.h.b16 %v110
    %v211 = vunpack.c.l.b16 %v111
    %v212 = vunpack.c.l.b16 %v112
    %v213 = vunpack.c.h.b16 %v112
    %v214 = vunpack.c.l.b16 %v113
    %v215 = vunpack.c.l.b16 %v114
    %v216 = vunpack.c.h.b16 %v114
    %v217 = vunpack.c.l.b16 %v115
    %v218 = vunpack.c.l.b16 %v116
    %v219 = vunpack.c.h.b16 %v116
    %v220 = vunpack.c.l.b16 %v117
    %v221 = vunpack.c.l.b16 %v118
    %v222 = vunpack.c.h.b16 %v118
    %v223 = vunpack.c.l.b16 %v119
    %v224 = vunpack.c.l.b16 %v120
    %v225 = vunpack.c.h.b16 %v120
    %v226 = vunpack.c.l.b16 %v121
    %v227 = vunpack.c.l.b16 %v122
    %v228 = vunpack.c.h.b16 %v122
    %v229 = vunpack.c.l.b16 %v123
    %v230 = vunpack.c.l.b16 %v124
    %v231 = vunpack.c.h.b16 %v124
    %v232 = vunpack.c.l.b16 %v125
    %v233 = vunpack.c.l.b16 %v126
    %v234 = vunpack.c.h.b16 %v126
    %v235 = vunpack.c.l.b16 %v127
    %v236 = vunpack.c.l.b16 %v128
    %v237 = vunpack.c.h.b16 %v128
    %v238 = vunpack.c.l.b16 %v129
    %v239 = vunpack.c.l.b16 %v130
    %v240 = vunpack.c.h.b16 %v130
    %v241 = vunpack.c.l.b16 %v131
    %v242 = vunpack.c.l.b16 %v132
    %v243 = vunpack.c.h.b16 %v132
    %v244 = vunpack.c.l.b16 %v133
    %v245 = vunpack.c.l.b16 %v134
    %v246 = vunpack.c.h.b16 %v134
    %v247 = vunpack.c.l.b16 %v135
    %v248 = vpack.c.b16 %v203, %v200
    %v249 = vpack.c.b16 %v204, %v201
    %v250 = vpack.c.b16 %v205, %v202
    %v251 = vpack.c.b16 %v209, %v206
    %v252 = vpack.c.b16 %v210, %v207
    %v253 = vpack.c.b16 %v211, %v208
    %v254 = vpack.c.b16 %v215, %v212
    %v255 = vpack.c.b16 %v216, %v213
    %v256 = vpack.c.b16 %v217, %v214
    %v257 = vpack.c.b16 %v221, %v218
    %v258 = vpack.c.b16 %v222, %v219
    %v259 = vpack.c.b16 %v223, %v220
    %v260 = vpack.c.b16 %v227, %v224
    %v261 = vpack.c.b16 %v228, %v225
    %v262 = vpack.c.b16 %v229, %v226
    %v263 = vpack.c.b16 %v233, %v230
    %v264 = vpack.c.b16 %v234, %v231
    %v265 = vpack.c.b16 %v235, %v232
    %v266 = vpack.c.b16 %v239, %v236
    %v267 = vpack.c.b16 %v240, %v237
    %v268 = vpack.c.b16 %v241, %v238
    %v269 = vpack.c.b16 %v245, %v242
    %v270 = vpack.c.b16 %v246, %v243
    %v271 = vpack.c.b16 %v247, %v244
    %296 = vmatpush.bf16.msra.mxu0 %v269
    %297 = vmatpush.bf16.msra.mxu0 %v266
    %298 = vmatpush.bf16.msra.mxu0 %v263
    %299 = vmatpush.bf16.msra.mxu0 %v260
    %300 = vmatpush.bf16.msra.mxu0 %v257
    %301 = vmatpush.bf16.msra.mxu0 %v254
    %302 = vmatpush.bf16.msra.mxu0 %v251
    %303 = vmatpush.bf16.msra.mxu0 %v248
    %304 = vmatmul.bf16.gmra.mxu0 %v160
    %v305 = vpop.f32.mrf.mxu0
    %v306 = vadd.f32 %v138, %v305
    %v307 = vpop.f32.mrf.mxu0
    %v308 = vadd.f32 %v138, %v307
    %309 = vmatmul.bf16.gmra.mxu0 %v161
    %v310 = vpop.f32.mrf.mxu0
    %v311 = vadd.f32 %v138, %v310
    %v312 = vpop.f32.mrf.mxu0
    %v313 = vadd.f32 %v138, %v312
    %314 = vmatmul.bf16.gmra.mxu0 %v162
    %v315 = vpop.f32.mrf.mxu0
    %v316 = vadd.f32 %v138, %v315
    %v317 = vpop.f32.mrf.mxu0
    %v318 = vadd.f32 %v138, %v317
    %319 = vmatmul.bf16.gmra.mxu0 %v163
    %v320 = vpop.f32.mrf.mxu0
    %v321 = vadd.f32 %v138, %v320
    %v322 = vpop.f32.mrf.mxu0
    %v323 = vadd.f32 %v138, %v322
    %324 = vdwg.mxu0
    %325 = vmatpush.bf16.msra.mxu0 %v270
    %326 = vmatpush.bf16.msra.mxu0 %v267
    %327 = vmatpush.bf16.msra.mxu0 %v264
    %328 = vmatpush.bf16.msra.mxu0 %v261
    %329 = vmatpush.bf16.msra.mxu0 %v258
    %330 = vmatpush.bf16.msra.mxu0 %v255
    %331 = vmatpush.bf16.msra.mxu0 %v252
    %332 = vmatpush.bf16.msra.mxu0 %v249
    %333 = vmatmul.bf16.gmra.mxu0 %v160
    %v334 = vpop.f32.mrf.mxu0
    %v335 = vadd.f32 %v139, %v334
    %v336 = vpop.f32.mrf.mxu0
    %v337 = vadd.f32 %v139, %v336
    %338 = vmatmul.bf16.gmra.mxu0 %v161
    %v339 = vpop.f32.mrf.mxu0
    %v340 = vadd.f32 %v139, %v339
    %v341 = vpop.f32.mrf.mxu0
    %v342 = vadd.f32 %v139, %v341
    %343 = vmatmul.bf16.gmra.mxu0 %v162
    %v344 = vpop.f32.mrf.mxu0
    %v345 = vadd.f32 %v139, %v344
    %v346 = vpop.f32.mrf.mxu0
    %v347 = vadd.f32 %v139, %v346
    %348 = vmatmul.bf16.gmra.mxu0 %v163
    %v349 = vpop.f32.mrf.mxu0
    %v350 = vadd.f32 %v139, %v349
    %v351 = vpop.f32.mrf.mxu0
    %v352 = vadd.f32 %v139, %v351
    %353 = vdwg.mxu0
    %354 = vmatpush.bf16.msra.mxu0 %v271
    %355 = vmatpush.bf16.msra.mxu0 %v268
    %356 = vmatpush.bf16.msra.mxu0 %v265
    %357 = vmatpush.bf16.msra.mxu0 %v262
    %358 = vmatpush.bf16.msra.mxu0 %v259
    %359 = vmatpush.bf16.msra.mxu0 %v256
    %360 = vmatpush.bf16.msra.mxu0 %v253
    %361 = vmatpush.bf16.msra.mxu0 %v250
    %362 = vmatmul.bf16.gmra.mxu0 %v160
    %v363 = vpop.f32.mrf.mxu0
    %v364 = vadd.f32 %v140, %v363
    %v365 = vpop.f32.mrf.mxu0
    %v366 = vadd.f32 %v140, %v365
    %367 = vmatmul.bf16.gmra.mxu0 %v161
    %v368 = vpop.f32.mrf.mxu0
    %v369 = vadd.f32 %v140, %v368
    %v370 = vpop.f32.mrf.mxu0
    %v371 = vadd.f32 %v140, %v370
    %372 = vmatmul.bf16.gmra.mxu0 %v162
    %v373 = vpop.f32.mrf.mxu0
    %v374 = vadd.f32 %v140, %v373
    %v375 = vpop.f32.mrf.mxu0
    %v376 = vadd.f32 %v140, %v375
    %377 = vmatmul.bf16.gmra.mxu0 %v163
    %v378 = vpop.f32.mrf.mxu0
    %v379 = vadd.f32 %v140, %v378
    %v380 = vpop.f32.mrf.mxu0
    %v381 = vadd.f32 %v140, %v380
    %382 = vdwg.mxu0
    %383 = vst [vmem:[#allocation2] sm:$0xff] %v306
    %384 = vst [vmem:[#allocation2 + $0x8] sm:$0xff] %v335
    %385 = vst [vmem:[#allocation2 + $0x10] sm:$0xff] %v364
    %386 = vst [vmem:[#allocation2 + $0x18] sm:$0xff] %v308
    %387 = vst [vmem:[#allocation2 + $0x20] sm:$0xff] %v337
    %388 = vst [vmem:[#allocation2 + $0x28] sm:$0xff] %v366
    %389 = vst [vmem:[#allocation2 + $0x30] sm:$0xff] %v311
    %390 = vst [vmem:[#allocation2 + $0x38] sm:$0xff] %v340
    %391 = vst [vmem:[#allocation2 + $0x40] sm:$0xff] %v369
    %392 = vst [vmem:[#allocation2 + $0x48] sm:$0xff] %v313
    %393 = vst [vmem:[#allocation2 + $0x50] sm:$0xff] %v342
    %394 = vst [vmem:[#allocation2 + $0x58] sm:$0xff] %v371
    %395 = vst [vmem:[#allocation2 + $0x60] sm:$0xff] %v316
    %396 = vst [vmem:[#allocation2 + $0x68] sm:$0xff] %v345
    %397 = vst [vmem:[#allocation2 + $0x70] sm:$0xff] %v374
    %398 = vst [vmem:[#allocation2 + $0x78] sm:$0xff] %v318
    %399 = vst [vmem:[#allocation2 + $0x80] sm:$0xff] %v347
    %400 = vst [vmem:[#allocation2 + $0x88] sm:$0xff] %v376
    %401 = vst [vmem:[#allocation2 + $0x90] sm:$0xff] %v321
    %402 = vst [vmem:[#allocation2 + $0x98] sm:$0xff] %v350
    %403 = vst [vmem:[#allocation2 + $0xa0] sm:$0xff] %v379
    %404 = vst [vmem:[#allocation2 + $0xa8] sm:$0xff] %v323
    %405 = vst [vmem:[#allocation2 + $0xb0] sm:$0xff] %v352
    %406 = vst [vmem:[#allocation2 + $0xb8] sm:$0xff] %v381
    %v407 = vld [vmem:[#allocation6] sm:$0xff]
    %v408 = vld [vmem:[#allocation6 + $0x8] sm:$0xf]
    %v409 = vld [vmem:[#allocation6 + $0xc] sm:$0xff]
    %v410 = vld [vmem:[#allocation6 + $0x14] sm:$0xf]
    %v411 = vld [vmem:[#allocation6 + $0x18] sm:$0xff]
    %v412 = vld [vmem:[#allocation6 + $0x20] sm:$0xf]
    %v413 = vld [vmem:[#allocation6 + $0x24] sm:$0xff]
    %v414 = vld [vmem:[#allocation6 + $0x2c] sm:$0xf]
    %v415 = vld [vmem:[#allocation6 + $0x30] sm:$0xff]
    %v416 = vld [vmem:[#allocation6 + $0x38] sm:$0xf]
    %v417 = vld [vmem:[#allocation6 + $0x3c] sm:$0xff]
    %v418 = vld [vmem:[#allocation6 + $0x44] sm:$0xf]
    %v419 = vld [vmem:[#allocation6 + $0x48] sm:$0xff]
    %v420 = vld [vmem:[#allocation6 + $0x50] sm:$0xf]
    %v421 = vld [vmem:[#allocation6 + $0x54] sm:$0xff]
    %v422 = vld [vmem:[#allocation6 + $0x5c] sm:$0xf]
    %v423 = vld [vmem:[#allocation6 + $0x60] sm:$0xff]
    %v424 = vld [vmem:[#allocation6 + $0x68] sm:$0xf]
    %v425 = vld [vmem:[#allocation6 + $0x6c] sm:$0xff]
    %v426 = vld [vmem:[#allocation6 + $0x74] sm:$0xf]
    %v427 = vld [vmem:[#allocation6 + $0x78] sm:$0xff]
    %v428 = vld [vmem:[#allocation6 + $0x80] sm:$0xf]
    %v429 = vld [vmem:[#allocation6 + $0x84] sm:$0xff]
    %v430 = vld [vmem:[#allocation6 + $0x8c] sm:$0xf]
    %v431 = vld [vmem:[#allocation6 + $0x90] sm:$0xff]
    %v432 = vld [vmem:[#allocation6 + $0x98] sm:$0xf]
    %v433 = vld [vmem:[#allocation6 + $0x9c] sm:$0xff]
    %v434 = vld [vmem:[#allocation6 + $0xa4] sm:$0xf]
    %v435 = vld [vmem:[#allocation6 + $0xa8] sm:$0xff]
    %v436 = vld [vmem:[#allocation6 + $0xb0] sm:$0xf]
    %v437 = vld [vmem:[#allocation6 + $0xb4] sm:$0xff]
    %v438 = vld [vmem:[#allocation6 + $0xbc] sm:$0xf]
    %v439 = vld [vmem:[%s4] sm:$0x1]
    %v441 = vperm.slane %v439, 0
    %v443 = vld [vmem:[#allocation2] sm:$0xff]
    %v444 = vld [vmem:[#allocation2 + $0x8] sm:$0xff]
    %v445 = vld [vmem:[#allocation2 + $0x10] sm:$0xff]
    %v478 = vunpack.c.l.b16 %v407
    %v479 = vunpack.c.h.b16 %v407
    %v480 = vunpack.c.l.b16 %v408
    %v481 = vunpack.c.l.b16 %v409
    %v482 = vunpack.c.h.b16 %v409
    %v483 = vunpack.c.l.b16 %v410
    %v484 = vunpack.c.l.b16 %v411
    %v485 = vunpack.c.h.b16 %v411
    %v486 = vunpack.c.l.b16 %v412
    %v487 = vunpack.c.l.b16 %v413
    %v488 = vunpack.c.h.b16 %v413
    %v489 = vunpack.c.l.b16 %v414
    %v490 = vunpack.c.l.b16 %v415
    %v491 = vunpack.c.h.b16 %v415
    %v492 = vunpack.c.l.b16 %v416
    %v493 = vunpack.c.l.b16 %v417
    %v494 = vunpack.c.h.b16 %v417
    %v495 = vunpack.c.l.b16 %v418
    %v496 = vunpack.c.l.b16 %v419
    %v497 = vunpack.c.h.b16 %v419
    %v498 = vunpack.c.l.b16 %v420
    %v499 = vunpack.c.l.b16 %v421
    %v500 = vunpack.c.h.b16 %v421
    %v501 = vunpack.c.l.b16 %v422
    %v502 = vunpack.c.l.b16 %v423
    %v503 = vunpack.c.h.b16 %v423
    %v504 = vunpack.c.l.b16 %v424
    %v505 = vunpack.c.l.b16 %v425
    %v506 = vunpack.c.h.b16 %v425
    %v507 = vunpack.c.l.b16 %v426
    %v508 = vunpack.c.l.b16 %v427
    %v509 = vunpack.c.h.b16 %v427
    %v510 = vunpack.c.l.b16 %v428
    %v511 = vunpack.c.l.b16 %v429
    %v512 = vunpack.c.h.b16 %v429
    %v513 = vunpack.c.l.b16 %v430
    %v514 = vunpack.c.l.b16 %v431
    %v515 = vunpack.c.h.b16 %v431
    %v516 = vunpack.c.l.b16 %v432
    %v517 = vunpack.c.l.b16 %v433
    %v518 = vunpack.c.h.b16 %v433
    %v519 = vunpack.c.l.b16 %v434
    %v520 = vunpack.c.l.b16 %v435
    %v521 = vunpack.c.h.b16 %v435
    %v522 = vunpack.c.l.b16 %v436
    %v523 = vunpack.c.l.b16 %v437
    %v524 = vunpack.c.h.b16 %v437
    %v525 = vunpack.c.l.b16 %v438
    %v526 = vpack.c.b16 %v481, %v478
    %v527 = vpack.c.b16 %v482, %v479
    %v528 = vpack.c.b16 %v483, %v480
    %v529 = vpack.c.b16 %v487, %v484
    %v530 = vpack.c.b16 %v488, %v485
    %v531 = vpack.c.b16 %v489, %v486
    %v532 = vpack.c.b16 %v493, %v490
    %v533 = vpack.c.b16 %v494, %v491
    %v534 = vpack.c.b16 %v495, %v492
    %v535 = vpack.c.b16 %v499, %v496
    %v536 = vpack.c.b16 %v500, %v497
    %v537 = vpack.c.b16 %v501, %v498
    %v538 = vpack.c.b16 %v505, %v502
    %v539 = vpack.c.b16 %v506, %v503
    %v540 = vpack.c.b16 %v507, %v504
    %v541 = vpack.c.b16 %v511, %v508
    %v542 = vpack.c.b16 %v512, %v509
    %v543 = vpack.c.b16 %v513, %v510
    %v544 = vpack.c.b16 %v517, %v514
    %v545 = vpack.c.b16 %v518, %v515
    %v546 = vpack.c.b16 %v519, %v516
    %v547 = vpack.c.b16 %v523, %v520
    %v548 = vpack.c.b16 %v524, %v521
    %v549 = vpack.c.b16 %v525, %v522
    %574 = vmatpush.bf16.msra.mxu0 %v547
    %575 = vmatpush.bf16.msra.mxu0 %v544
    %576 = vmatpush.bf16.msra.mxu0 %v541
    %577 = vmatpush.bf16.msra.mxu0 %v538
    %578 = vmatpush.bf16.msra.mxu0 %v535
    %579 = vmatpush.bf16.msra.mxu0 %v532
    %580 = vmatpush.bf16.msra.mxu0 %v529
    %581 = vmatpush.bf16.msra.mxu0 %v526
    %582 = vmatmul.bf16.gmra.mxu0 0
    %v583 = vpop.f32.mrf.mxu0
    %v584 = vadd.f32 0.0, %v583
    %v585 = vpop.f32.mrf.mxu0
    %586 = vdwg.mxu0
    %587 = vmatpush.bf16.msra.mxu0 %v548
    %588 = vmatpush.bf16.msra.mxu0 %v545
    %589 = vmatpush.bf16.msra.mxu0 %v542
    %590 = vmatpush.bf16.msra.mxu0 %v539
    %591 = vmatpush.bf16.msra.mxu0 %v536
    %592 = vmatpush.bf16.msra.mxu0 %v533
    %593 = vmatpush.bf16.msra.mxu0 %v530
    %594 = vmatpush.bf16.msra.mxu0 %v527
    %595 = vmatmul.bf16.gmra.mxu0 0
    %v596 = vpop.f32.mrf.mxu0
    %v597 = vadd.f32 0.0, %v596
    %v598 = vpop.f32.mrf.mxu0
    %599 = vdwg.mxu0
    %600 = vmatpush.bf16.msra.mxu0 %v549
    %601 = vmatpush.bf16.msra.mxu0 %v546
    %602 = vmatpush.bf16.msra.mxu0 %v543
    %603 = vmatpush.bf16.msra.mxu0 %v540
    %604 = vmatpush.bf16.msra.mxu0 %v537
    %605 = vmatpush.bf16.msra.mxu0 %v534
    %606 = vmatpush.bf16.msra.mxu0 %v531
    %607 = vmatpush.bf16.msra.mxu0 %v528
    %608 = vmatmul.bf16.gmra.mxu0 0
    %v609 = vpop.f32.mrf.mxu0
    %v610 = vadd.f32 0.0, %v609
    %v611 = vpop.f32.mrf.mxu0
    %612 = vdwg.mxu0
    %v613 = vadd.f32 %v443, %v584
    %v614 = vadd.f32 %v444, %v597
    %v615 = vsub.f32 0.0, %v613
    %v616 = vsub.f32 0.0, %v614
    %v617 = vmul.f32 %v615, 1.442695
    %v618 = vpow.pop %v617
    %v619 = vmul.f32 %v616, 1.442695
    %v620 = vpow.pop %v619
    %v621 = vadd.f32 %v618, 1.0
    %v622 = vadd.f32 %v620, 1.0
    %v623 = vrcp.pop %v621
    %v624 = vrcp.pop %v622
    %v625 = vadd.f32 %v610, %v441
    %v626 = vmul.f32 %v623, %v625
    %v627 = vadd.f32 %v445, %v626
    %v628 = vtanh.pop %v627
    %v629 = vsub.f32 1.0, %v624
    %v630 = vmul.f32 %v629, %v628
    %v631 = vmul.f32 %v624, 0.0
    %v632 = vadd.f32 %v630, %v631
    %633 = vst [vmem:[#allocation3] sm:$0xff] %v632
    %s634 = scalar_lea.vmem [#allocation2], 24
    %v635 = vld [vmem:[%s634] sm:$0xff]
    %v636 = vld [vmem:[%s634 + $0x8] sm:$0xff]
    %v637 = vld [vmem:[%s634 + $0x10] sm:$0xff]
    %v638 = vpack.c.bf16 %v632, %v632
    %639 = vmatpush.bf16.msra.mxu0 %v547
    %640 = vmatpush.bf16.msra.mxu0 %v544
    %641 = vmatpush.bf16.msra.mxu0 %v541
    %642 = vmatpush.bf16.msra.mxu0 %v538
    %643 = vmatpush.bf16.msra.mxu0 %v535
    %644 = vmatpush.bf16.msra.mxu0 %v532
    %645 = vmatpush.bf16.msra.mxu0 %v529
    %646 = vmatpush.bf16.msra.mxu0 %v526
    %647 = vmatmul.bf16.gmra.mxu0 %v638
    %v648 = vpop.f32.mrf.mxu0
    %v649 = vadd.f32 0.0, %v648
    %v650 = vpop.f32.mrf.mxu0
    %651 = vdwg.mxu0
    %652 = vmatpush.bf16.msra.mxu0 %v548
    %653 = vmatpush.bf16.msra.mxu0 %v545
    %654 = vmatpush.bf16.msra.mxu0 %v542
    %655 = vmatpush.bf16.msra.mxu0 %v539
    %656 = vmatpush.bf16.msra.mxu0 %v536
    %657 = vmatpush.bf16.msra.mxu0 %v533
    %658 = vmatpush.bf16.msra.mxu0 %v530
    %659 = vmatpush.bf16.msra.mxu0 %v527
    %660 = vmatmul.bf16.gmra.mxu0 %v638
    %v661 = vpop.f32.mrf.mxu0
    %v662 = vadd.f32 0.0, %v661
    %v663 = vpop.f32.mrf.mxu0
    %664 = vdwg.mxu0
    %665 = vmatpush.bf16.msra.mxu0 %v549
    %666 = vmatpush.bf16.msra.mxu0 %v546
    %667 = vmatpush.bf16.msra.mxu0 %v543
    %668 = vmatpush.bf16.msra.mxu0 %v540
    %669 = vmatpush.bf16.msra.mxu0 %v537
    %670 = vmatpush.bf16.msra.mxu0 %v534
    %671 = vmatpush.bf16.msra.mxu0 %v531
    %672 = vmatpush.bf16.msra.mxu0 %v528
    %673 = vmatmul.bf16.gmra.mxu0 %v638
    %v674 = vpop.f32.mrf.mxu0
    %v675 = vadd.f32 0.0, %v674
    %v676 = vpop.f32.mrf.mxu0
    %677 = vdwg.mxu0
    %v678 = vadd.f32 %v635, %v649
    %v679 = vadd.f32 %v636, %v662
    %v680 = vsub.f32 0.0, %v678
    %v681 = vsub.f32 0.0, %v679
    %v682 = vmul.f32 %v680, 1.442695
    %v683 = vpow.pop %v682
    %v684 = vmul.f32 %v681, 1.442695
    %v685 = vpow.pop %v684
    %v686 = vadd.f32 %v683, 1.0
    %v687 = vadd.f32 %v685, 1.0
    %v688 = vrcp.pop %v686
    %v689 = vrcp.pop %v687
    %v690 = vadd.f32 %v675, %v441
    %v691 = vmul.f32 %v688, %v690
    %v692 = vadd.f32 %v637, %v691
    %v693 = vtanh.pop %v692
    %v694 = vsub.f32 1.0, %v689
    %v695 = vmul.f32 %v694, %v693
    %v696 = vmul.f32 %v689, %v632
    %v697 = vadd.f32 %v695, %v696
    %s698 = scalar_lea.vmem [#allocation3], 8
    %699 = vst [vmem:[%s698] sm:$0xff] %v697
    %s700 = scalar_lea.vmem [#allocation2], 48
    %v701 = vld [vmem:[%s700] sm:$0xff]
    %v702 = vld [vmem:[%s700 + $0x8] sm:$0xff]
    %v703 = vld [vmem:[%s700 + $0x10] sm:$0xff]
    %v704 = vpack.c.bf16 %v697, %v697
    %705 = vmatpush.bf16.msra.mxu0 %v547
    %706 = vmatpush.bf16.msra.mxu0 %v544
    %707 = vmatpush.bf16.msra.mxu0 %v541
    %708 = vmatpush.bf16.msra.mxu0 %v538
    %709 = vmatpush.bf16.msra.mxu0 %v535
    %710 = vmatpush.bf16.msra.mxu0 %v532
    %711 = vmatpush.bf16.msra.mxu0 %v529
    %712 = vmatpush.bf16.msra.mxu0 %v526
    %713 = vmatmul.bf16.gmra.mxu0 %v704
    %v714 = vpop.f32.mrf.mxu0
    %v715 = vadd.f32 0.0, %v714
    %v716 = vpop.f32.mrf.mxu0
    %717 = vdwg.mxu0
    %718 = vmatpush.bf16.msra.mxu0 %v548
    %719 = vmatpush.bf16.msra.mxu0 %v545
    %720 = vmatpush.bf16.msra.mxu0 %v542
    %721 = vmatpush.bf16.msra.mxu0 %v539
    %722 = vmatpush.bf16.msra.mxu0 %v536
    %723 = vmatpush.bf16.msra.mxu0 %v533
    %724 = vmatpush.bf16.msra.mxu0 %v530
    %725 = vmatpush.bf16.msra.mxu0 %v527
    %726 = vmatmul.bf16.gmra.mxu0 %v704
    %v727 = vpop.f32.mrf.mxu0
    %v728 = vadd.f32 0.0, %v727
    %v729 = vpop.f32.mrf.mxu0
    %730 = vdwg.mxu0
    %731 = vmatpush.bf16.msra.mxu0 %v549
    %732 = vmatpush.bf16.msra.mxu0 %v546
    %733 = vmatpush.bf16.msra.mxu0 %v543
    %734 = vmatpush.bf16.msra.mxu0 %v540
    %735 = vmatpush.bf16.msra.mxu0 %v537
    %736 = vmatpush.bf16.msra.mxu0 %v534
    %737 = vmatpush.bf16.msra.mxu0 %v531
    %738 = vmatpush.bf16.msra.mxu0 %v528
    %739 = vmatmul.bf16.gmra.mxu0 %v704
    %v740 = vpop.f32.mrf.mxu0
    %v741 = vadd.f32 0.0, %v740
    %v742 = vpop.f32.mrf.mxu0
    %743 = vdwg.mxu0
    %v744 = vadd.f32 %v701, %v715
    %v745 = vadd.f32 %v702, %v728
    %v746 = vsub.f32 0.0, %v744
    %v747 = vsub.f32 0.0, %v745
    %v748 = vmul.f32 %v746, 1.442695
    %v749 = vpow.pop %v748
    %v750 = vmul.f32 %v747, 1.442695
    %v751 = vpow.pop %v750
    %v752 = vadd.f32 %v749, 1.0
    %v753 = vadd.f32 %v751, 1.0
    %v754 = vrcp.pop %v752
    %v755 = vrcp.pop %v753
    %v756 = vadd.f32 %v741, %v441
    %v757 = vmul.f32 %v754, %v756
    %v758 = vadd.f32 %v703, %v757
    %v759 = vtanh.pop %v758
    %v760 = vsub.f32 1.0, %v755
    %v761 = vmul.f32 %v760, %v759
    %v762 = vmul.f32 %v755, %v697
    %v763 = vadd.f32 %v761, %v762
    %s764 = scalar_lea.vmem [#allocation3], 16
    %765 = vst [vmem:[%s764] sm:$0xff] %v763
    %s766 = scalar_lea.vmem [#allocation2], 72
    %v767 = vld [vmem:[%s766] sm:$0xff]
    %v768 = vld [vmem:[%s766 + $0x8] sm:$0xff]
    %v769 = vld [vmem:[%s766 + $0x10] sm:$0xff]
    %v770 = vpack.c.bf16 %v763, %v763
    %771 = vmatpush.bf16.msra.mxu0 %v547
    %772 = vmatpush.bf16.msra.mxu0 %v544
    %773 = vmatpush.bf16.msra.mxu0 %v541
    %774 = vmatpush.bf16.msra.mxu0 %v538
    %775 = vmatpush.bf16.msra.mxu0 %v535
    %776 = vmatpush.bf16.msra.mxu0 %v532
    %777 = vmatpush.bf16.msra.mxu0 %v529
    %778 = vmatpush.bf16.msra.mxu0 %v526
    %779 = vmatmul.bf16.gmra.mxu0 %v770
    %v780 = vpop.f32.mrf.mxu0
    %v781 = vadd.f32 0.0, %v780
    %v782 = vpop.f32.mrf.mxu0
    %783 = vdwg.mxu0
    %784 = vmatpush.bf16.msra.mxu0 %v548
    %785 = vmatpush.bf16.msra.mxu0 %v545
    %786 = vmatpush.bf16.msra.mxu0 %v542
    %787 = vmatpush.bf16.msra.mxu0 %v539
    %788 = vmatpush.bf16.msra.mxu0 %v536
    %789 = vmatpush.bf16.msra.mxu0 %v533
    %790 = vmatpush.bf16.msra.mxu0 %v530
    %791 = vmatpush.bf16.msra.mxu0 %v527
    %792 = vmatmul.bf16.gmra.mxu0 %v770
    %v793 = vpop.f32.mrf.mxu0
    %v794 = vadd.f32 0.0, %v793
    %v795 = vpop.f32.mrf.mxu0
    %796 = vdwg.mxu0
    %797 = vmatpush.bf16.msra.mxu0 %v549
    %798 = vmatpush.bf16.msra.mxu0 %v546
    %799 = vmatpush.bf16.msra.mxu0 %v543
    %800 = vmatpush.bf16.msra.mxu0 %v540
    %801 = vmatpush.bf16.msra.mxu0 %v537
    %802 = vmatpush.bf16.msra.mxu0 %v534
    %803 = vmatpush.bf16.msra.mxu0 %v531
    %804 = vmatpush.bf16.msra.mxu0 %v528
    %805 = vmatmul.bf16.gmra.mxu0 %v770
    %v806 = vpop.f32.mrf.mxu0
    %v807 = vadd.f32 0.0, %v806
    %v808 = vpop.f32.mrf.mxu0
    %809 = vdwg.mxu0
    %v810 = vadd.f32 %v767, %v781
    %v811 = vadd.f32 %v768, %v794
    %v812 = vsub.f32 0.0, %v810
    %v813 = vsub.f32 0.0, %v811
    %v814 = vmul.f32 %v812, 1.442695
    %v815 = vpow.pop %v814
    %v816 = vmul.f32 %v813, 1.442695
    %v817 = vpow.pop %v816
    %v818 = vadd.f32 %v815, 1.0
    %v819 = vadd.f32 %v817, 1.0
    %v820 = vrcp.pop %v818
    %v821 = vrcp.pop %v819
    %v822 = vadd.f32 %v807, %v441
    %v823 = vmul.f32 %v820, %v822
    %v824 = vadd.f32 %v769, %v823
    %v825 = vtanh.pop %v824
    %v826 = vsub.f32 1.0, %v821
    %v827 = vmul.f32 %v826, %v825
    %v828 = vmul.f32 %v821, %v763
    %v829 = vadd.f32 %v827, %v828
    %s830 = scalar_lea.vmem [#allocation3], 24
    %831 = vst [vmem:[%s830] sm:$0xff] %v829
    %s832 = scalar_lea.vmem [#allocation2], 96
    %v833 = vld [vmem:[%s832] sm:$0xff]
    %v834 = vld [vmem:[%s832 + $0x8] sm:$0xff]
    %v835 = vld [vmem:[%s832 + $0x10] sm:$0xff]
    %v836 = vpack.c.bf16 %v829, %v829
    %837 = vmatpush.bf16.msra.mxu0 %v547
    %838 = vmatpush.bf16.msra.mxu0 %v544
    %839 = vmatpush.bf16.msra.mxu0 %v541
    %840 = vmatpush.bf16.msra.mxu0 %v538
    %841 = vmatpush.bf16.msra.mxu0 %v535
    %842 = vmatpush.bf16.msra.mxu0 %v532
    %843 = vmatpush.bf16.msra.mxu0 %v529
    %844 = vmatpush.bf16.msra.mxu0 %v526
    %845 = vmatmul.bf16.gmra.mxu0 %v836
    %v846 = vpop.f32.mrf.mxu0
    %v847 = vadd.f32 0.0, %v846
    %v848 = vpop.f32.mrf.mxu0
    %849 = vdwg.mxu0
    %850 = vmatpush.bf16.msra.mxu0 %v548
    %851 = vmatpush.bf16.msra.mxu0 %v545
    %852 = vmatpush.bf16.msra.mxu0 %v542
    %853 = vmatpush.bf16.msra.mxu0 %v539
    %854 = vmatpush.bf16.msra.mxu0 %v536
    %855 = vmatpush.bf16.msra.mxu0 %v533
    %856 = vmatpush.bf16.msra.mxu0 %v530
    %857 = vmatpush.bf16.msra.mxu0 %v527
    %858 = vmatmul.bf16.gmra.mxu0 %v836
    %v859 = vpop.f32.mrf.mxu0
    %v860 = vadd.f32 0.0, %v859
    %v861 = vpop.f32.mrf.mxu0
    %862 = vdwg.mxu0
    %863 = vmatpush.bf16.msra.mxu0 %v549
    %864 = vmatpush.bf16.msra.mxu0 %v546
    %865 = vmatpush.bf16.msra.mxu0 %v543
    %866 = vmatpush.bf16.msra.mxu0 %v540
    %867 = vmatpush.bf16.msra.mxu0 %v537
    %868 = vmatpush.bf16.msra.mxu0 %v534
    %869 = vmatpush.bf16.msra.mxu0 %v531
    %870 = vmatpush.bf16.msra.mxu0 %v528
    %871 = vmatmul.bf16.gmra.mxu0 %v836
    %v872 = vpop.f32.mrf.mxu0
    %v873 = vadd.f32 0.0, %v872
    %v874 = vpop.f32.mrf.mxu0
    %875 = vdwg.mxu0
    %v876 = vadd.f32 %v833, %v847
    %v877 = vadd.f32 %v834, %v860
    %v878 = vsub.f32 0.0, %v876
    %v879 = vsub.f32 0.0, %v877
    %v880 = vmul.f32 %v878, 1.442695
    %v881 = vpow.pop %v880
    %v882 = vmul.f32 %v879, 1.442695
    %v883 = vpow.pop %v882
    %v884 = vadd.f32 %v881, 1.0
    %v885 = vadd.f32 %v883, 1.0
    %v886 = vrcp.pop %v884
    %v887 = vrcp.pop %v885
    %v888 = vadd.f32 %v873, %v441
    %v889 = vmul.f32 %v886, %v888
    %v890 = vadd.f32 %v835, %v889
    %v891 = vtanh.pop %v890
    %v892 = vsub.f32 1.0, %v887
    %v893 = vmul.f32 %v892, %v891
    %v894 = vmul.f32 %v887, %v829
    %v895 = vadd.f32 %v893, %v894
    %s896 = scalar_lea.vmem [#allocation3], 32
    %897 = vst [vmem:[%s896] sm:$0xff] %v895
    %s898 = scalar_lea.vmem [#allocation2], 120
    %v899 = vld [vmem:[%s898] sm:$0xff]
    %v900 = vld [vmem:[%s898 + $0x8] sm:$0xff]
    %v901 = vld [vmem:[%s898 + $0x10] sm:$0xff]
    %v902 = vpack.c.bf16 %v895, %v895
    %903 = vmatpush.bf16.msra.mxu0 %v547
    %904 = vmatpush.bf16.msra.mxu0 %v544
    %905 = vmatpush.bf16.msra.mxu0 %v541
    %906 = vmatpush.bf16.msra.mxu0 %v538
    %907 = vmatpush.bf16.msra.mxu0 %v535
    %908 = vmatpush.bf16.msra.mxu0 %v532
    %909 = vmatpush.bf16.msra.mxu0 %v529
    %910 = vmatpush.bf16.msra.mxu0 %v526
    %911 = vmatmul.bf16.gmra.mxu0 %v902
    %v912 = vpop.f32.mrf.mxu0
    %v913 = vadd.f32 0.0, %v912
    %v914 = vpop.f32.mrf.mxu0
    %915 = vdwg.mxu0
    %916 = vmatpush.bf16.msra.mxu0 %v548
    %917 = vmatpush.bf16.msra.mxu0 %v545
    %918 = vmatpush.bf16.msra.mxu0 %v542
    %919 = vmatpush.bf16.msra.mxu0 %v539
    %920 = vmatpush.bf16.msra.mxu0 %v536
    %921 = vmatpush.bf16.msra.mxu0 %v533
    %922 = vmatpush.bf16.msra.mxu0 %v530
    %923 = vmatpush.bf16.msra.mxu0 %v527
    %924 = vmatmul.bf16.gmra.mxu0 %v902
    %v925 = vpop.f32.mrf.mxu0
    %v926 = vadd.f32 0.0, %v925
    %v927 = vpop.f32.mrf.mxu0
    %928 = vdwg.mxu0
    %929 = vmatpush.bf16.msra.mxu0 %v549
    %930 = vmatpush.bf16.msra.mxu0 %v546
    %931 = vmatpush.bf16.msra.mxu0 %v543
    %932 = vmatpush.bf16.msra.mxu0 %v540
    %933 = vmatpush.bf16.msra.mxu0 %v537
    %934 = vmatpush.bf16.msra.mxu0 %v534
    %935 = vmatpush.bf16.msra.mxu0 %v531
    %936 = vmatpush.bf16.msra.mxu0 %v528
    %937 = vmatmul.bf16.gmra.mxu0 %v902
    %v938 = vpop.f32.mrf.mxu0
    %v939 = vadd.f32 0.0, %v938
    %v940 = vpop.f32.mrf.mxu0
    %941 = vdwg.mxu0
    %v942 = vadd.f32 %v899, %v913
    %v943 = vadd.f32 %v900, %v926
    %v944 = vsub.f32 0.0, %v942
    %v945 = vsub.f32 0.0, %v943
    %v946 = vmul.f32 %v944, 1.442695
    %v947 = vpow.pop %v946
    %v948 = vmul.f32 %v945, 1.442695
    %v949 = vpow.pop %v948
    %v950 = vadd.f32 %v947, 1.0
    %v951 = vadd.f32 %v949, 1.0
    %v952 = vrcp.pop %v950
    %v953 = vrcp.pop %v951
    %v954 = vadd.f32 %v939, %v441
    %v955 = vmul.f32 %v952, %v954
    %v956 = vadd.f32 %v901, %v955
    %v957 = vtanh.pop %v956
    %v958 = vsub.f32 1.0, %v953
    %v959 = vmul.f32 %v958, %v957
    %v960 = vmul.f32 %v953, %v895
    %v961 = vadd.f32 %v959, %v960
    %s962 = scalar_lea.vmem [#allocation3], 40
    %963 = vst [vmem:[%s962] sm:$0xff] %v961
    %s964 = scalar_lea.vmem [#allocation2], 144
    %v965 = vld [vmem:[%s964] sm:$0xff]
    %v966 = vld [vmem:[%s964 + $0x8] sm:$0xff]
    %v967 = vld [vmem:[%s964 + $0x10] sm:$0xff]
    %v968 = vpack.c.bf16 %v961, %v961
    %969 = vmatpush.bf16.msra.mxu0 %v547
    %970 = vmatpush.bf16.msra.mxu0 %v544
    %971 = vmatpush.bf16.msra.mxu0 %v541
    %972 = vmatpush.bf16.msra.mxu0 %v538
    %973 = vmatpush.bf16.msra.mxu0 %v535
    %974 = vmatpush.bf16.msra.mxu0 %v532
    %975 = vmatpush.bf16.msra.mxu0 %v529
    %976 = vmatpush.bf16.msra.mxu0 %v526
    %977 = vmatmul.bf16.gmra.mxu0 %v968
    %v978 = vpop.f32.mrf.mxu0
    %v979 = vadd.f32 0.0, %v978
    %v980 = vpop.f32.mrf.mxu0
    %981 = vdwg.mxu0
    %982 = vmatpush.bf16.msra.mxu0 %v548
    %983 = vmatpush.bf16.msra.mxu0 %v545
    %984 = vmatpush.bf16.msra.mxu0 %v542
    %985 = vmatpush.bf16.msra.mxu0 %v539
    %986 = vmatpush.bf16.msra.mxu0 %v536
    %987 = vmatpush.bf16.msra.mxu0 %v533
    %988 = vmatpush.bf16.msra.mxu0 %v530
    %989 = vmatpush.bf16.msra.mxu0 %v527
    %990 = vmatmul.bf16.gmra.mxu0 %v968
    %v991 = vpop.f32.mrf.mxu0
    %v992 = vadd.f32 0.0, %v991
    %v993 = vpop.f32.mrf.mxu0
    %994 = vdwg.mxu0
    %995 = vmatpush.bf16.msra.mxu0 %v549
    %996 = vmatpush.bf16.msra.mxu0 %v546
    %997 = vmatpush.bf16.msra.mxu0 %v543
    %998 = vmatpush.bf16.msra.mxu0 %v540
    %999 = vmatpush.bf16.msra.mxu0 %v537
    %1000 = vmatpush.bf16.msra.mxu0 %v534
    %1001 = vmatpush.bf16.msra.mxu0 %v531
    %1002 = vmatpush.bf16.msra.mxu0 %v528
    %1003 = vmatmul.bf16.gmra.mxu0 %v968
    %v1004 = vpop.f32.mrf.mxu0
    %v1005 = vadd.f32 0.0, %v1004
    %v1006 = vpop.f32.mrf.mxu0
    %1007 = vdwg.mxu0
    %v1008 = vadd.f32 %v965, %v979
    %v1009 = vadd.f32 %v966, %v992
    %v1010 = vsub.f32 0.0, %v1008
    %v1011 = vsub.f32 0.0, %v1009
    %v1012 = vmul.f32 %v1010, 1.442695
    %v1013 = vpow.pop %v1012
    %v1014 = vmul.f32 %v1011, 1.442695
    %v1015 = vpow.pop %v1014
    %v1016 = vadd.f32 %v1013, 1.0
    %v1017 = vadd.f32 %v1015, 1.0
    %v1018 = vrcp.pop %v1016
    %v1019 = vrcp.pop %v1017
    %v1020 = vadd.f32 %v1005, %v441
    %v1021 = vmul.f32 %v1018, %v1020
    %v1022 = vadd.f32 %v967, %v1021
    %v1023 = vtanh.pop %v1022
    %v1024 = vsub.f32 1.0, %v1019
    %v1025 = vmul.f32 %v1024, %v1023
    %v1026 = vmul.f32 %v1019, %v961
    %v1027 = vadd.f32 %v1025, %v1026
    %s1028 = scalar_lea.vmem [#allocation3], 48
    %1029 = vst [vmem:[%s1028] sm:$0xff] %v1027
    %s1030 = scalar_lea.vmem [#allocation2], 168
    %v1031 = vld [vmem:[%s1030] sm:$0xff]
    %v1032 = vld [vmem:[%s1030 + $0x8] sm:$0xff]
    %v1033 = vld [vmem:[%s1030 + $0x10] sm:$0xff]
    %v1034 = vpack.c.bf16 %v1027, %v1027
    %1035 = vmatpush.bf16.msra.mxu0 %v547
    %1036 = vmatpush.bf16.msra.mxu0 %v544
    %1037 = vmatpush.bf16.msra.mxu0 %v541
    %1038 = vmatpush.bf16.msra.mxu0 %v538
    %1039 = vmatpush.bf16.msra.mxu0 %v535
    %1040 = vmatpush.bf16.msra.mxu0 %v532
    %1041 = vmatpush.bf16.msra.mxu0 %v529
    %1042 = vmatpush.bf16.msra.mxu0 %v526
    %1043 = vmatmul.bf16.gmra.mxu0 %v1034
    %v1044 = vpop.f32.mrf.mxu0
    %v1045 = vadd.f32 0.0, %v1044
    %v1046 = vpop.f32.mrf.mxu0
    %1047 = vdwg.mxu0
    %1048 = vmatpush.bf16.msra.mxu0 %v548
    %1049 = vmatpush.bf16.msra.mxu0 %v545
    %1050 = vmatpush.bf16.msra.mxu0 %v542
    %1051 = vmatpush.bf16.msra.mxu0 %v539
    %1052 = vmatpush.bf16.msra.mxu0 %v536
    %1053 = vmatpush.bf16.msra.mxu0 %v533
    %1054 = vmatpush.bf16.msra.mxu0 %v530
    %1055 = vmatpush.bf16.msra.mxu0 %v527
    %1056 = vmatmul.bf16.gmra.mxu0 %v1034
    %v1057 = vpop.f32.mrf.mxu0
    %v1058 = vadd.f32 0.0, %v1057
    %v1059 = vpop.f32.mrf.mxu0
    %1060 = vdwg.mxu0
    %1061 = vmatpush.bf16.msra.mxu0 %v549
    %1062 = vmatpush.bf16.msra.mxu0 %v546
    %1063 = vmatpush.bf16.msra.mxu0 %v543
    %1064 = vmatpush.bf16.msra.mxu0 %v540
    %1065 = vmatpush.bf16.msra.mxu0 %v537
    %1066 = vmatpush.bf16.msra.mxu0 %v534
    %1067 = vmatpush.bf16.msra.mxu0 %v531
    %1068 = vmatpush.bf16.msra.mxu0 %v528
    %1069 = vmatmul.bf16.gmra.mxu0 %v1034
    %v1070 = vpop.f32.mrf.mxu0
    %v1071 = vadd.f32 0.0, %v1070
    %v1072 = vpop.f32.mrf.mxu0
    %1073 = vdwg.mxu0
    %v1074 = vadd.f32 %v1031, %v1045
    %v1075 = vadd.f32 %v1032, %v1058
    %v1076 = vsub.f32 0.0, %v1074
    %v1077 = vsub.f32 0.0, %v1075
    %v1078 = vmul.f32 %v1076, 1.442695
    %v1079 = vpow.pop %v1078
    %v1080 = vmul.f32 %v1077, 1.442695
    %v1081 = vpow.pop %v1080
    %v1082 = vadd.f32 %v1079, 1.0
    %v1083 = vadd.f32 %v1081, 1.0
    %v1084 = vrcp.pop %v1082
    %v1085 = vrcp.pop %v1083
    %v1086 = vadd.f32 %v1071, %v441
    %v1087 = vmul.f32 %v1084, %v1086
    %v1088 = vadd.f32 %v1033, %v1087
    %v1089 = vtanh.pop %v1088
    %v1090 = vsub.f32 1.0, %v1085
    %v1091 = vmul.f32 %v1090, %v1089
    %v1092 = vmul.f32 %v1085, %v1027
    %v1093 = vadd.f32 %v1091, %v1092
    %s1094 = scalar_lea.vmem [#allocation3], 56
    %1095 = vst [vmem:[%s1094] sm:$0xff] %v1093
    %v1096 = vld [vmem:[#allocation3] sm:$0xff]
    %v1097 = vld [vmem:[#allocation3 + $0x8] sm:$0xff]
    %v1098 = vld [vmem:[#allocation3 + $0x10] sm:$0xff]
    %v1099 = vld [vmem:[#allocation3 + $0x18] sm:$0xff]
    %v1100 = vld [vmem:[#allocation3 + $0x20] sm:$0xff]
    %v1101 = vld [vmem:[#allocation3 + $0x28] sm:$0xff]
    %v1102 = vld [vmem:[#allocation3 + $0x30] sm:$0xff]
    %v1103 = vld [vmem:[#allocation3 + $0x38] sm:$0xff]
    %v1104 = vpack.c.bf16 %v1097, %v1096
    %v1105 = vpack.c.bf16 %v1099, %v1098
    %v1106 = vpack.c.bf16 %v1101, %v1100
    %v1107 = vpack.c.bf16 %v1103, %v1102
    %v1108 = vld [vmem:[#allocation8] sm:$0xff]
    %v1109 = vld [vmem:[#allocation8 + $0x8] sm:$0xf]
    %v1110 = vld [vmem:[#allocation8 + $0xc] sm:$0xff]
    %v1111 = vld [vmem:[#allocation8 + $0x14] sm:$0xf]
    %v1112 = vld [vmem:[#allocation8 + $0x18] sm:$0xff]
    %v1113 = vld [vmem:[#allocation8 + $0x20] sm:$0xf]
    %v1114 = vld [vmem:[#allocation8 + $0x24] sm:$0xff]
    %v1115 = vld [vmem:[#allocation8 + $0x2c] sm:$0xf]
    %v1116 = vld [vmem:[#allocation8 + $0x30] sm:$0xff]
    %v1117 = vld [vmem:[#allocation8 + $0x38] sm:$0xf]
    %v1118 = vld [vmem:[#allocation8 + $0x3c] sm:$0xff]
    %v1119 = vld [vmem:[#allocation8 + $0x44] sm:$0xf]
    %v1120 = vld [vmem:[#allocation8 + $0x48] sm:$0xff]
    %v1121 = vld [vmem:[#allocation8 + $0x50] sm:$0xf]
    %v1122 = vld [vmem:[#allocation8 + $0x54] sm:$0xff]
    %v1123 = vld [vmem:[#allocation8 + $0x5c] sm:$0xf]
    %v1124 = vld [vmem:[#allocation8 + $0x60] sm:$0xff]
    %v1125 = vld [vmem:[#allocation8 + $0x68] sm:$0xf]
    %v1126 = vld [vmem:[#allocation8 + $0x6c] sm:$0xff]
    %v1127 = vld [vmem:[#allocation8 + $0x74] sm:$0xf]
    %v1128 = vld [vmem:[#allocation8 + $0x78] sm:$0xff]
    %v1129 = vld [vmem:[#allocation8 + $0x80] sm:$0xf]
    %v1130 = vld [vmem:[#allocation8 + $0x84] sm:$0xff]
    %v1131 = vld [vmem:[#allocation8 + $0x8c] sm:$0xf]
    %v1132 = vld [vmem:[#allocation8 + $0x90] sm:$0xff]
    %v1133 = vld [vmem:[#allocation8 + $0x98] sm:$0xf]
    %v1134 = vld [vmem:[#allocation8 + $0x9c] sm:$0xff]
    %v1135 = vld [vmem:[#allocation8 + $0xa4] sm:$0xf]
    %v1136 = vld [vmem:[#allocation8 + $0xa8] sm:$0xff]
    %v1137 = vld [vmem:[#allocation8 + $0xb0] sm:$0xf]
    %v1138 = vld [vmem:[#allocation8 + $0xb4] sm:$0xff]
    %v1139 = vld [vmem:[#allocation8 + $0xbc] sm:$0xf]
    %v1140 = vld [vmem:[%s7] sm:$0x7]
    %v1142 = vperm.slane %v1140, 0
    %v1143 = vperm.slane %v1140, 1
    %v1144 = vperm.slane %v1140, 2
    %v1180 = vunpack.c.l.b16 %v1108
    %v1181 = vunpack.c.h.b16 %v1108
    %v1182 = vunpack.c.l.b16 %v1109
    %v1183 = vunpack.c.l.b16 %v1110
    %v1184 = vunpack.c.h.b16 %v1110
    %v1185 = vunpack.c.l.b16 %v1111
    %v1186 = vunpack.c.l.b16 %v1112
    %v1187 = vunpack.c.h.b16 %v1112
    %v1188 = vunpack.c.l.b16 %v1113
    %v1189 = vunpack.c.l.b16 %v1114
    %v1190 = vunpack.c.h.b16 %v1114
    %v1191 = vunpack.c.l.b16 %v1115
    %v1192 = vunpack.c.l.b16 %v1116
    %v1193 = vunpack.c.h.b16 %v1116
    %v1194 = vunpack.c.l.b16 %v1117
    %v1195 = vunpack.c.l.b16 %v1118
    %v1196 = vunpack.c.h.b16 %v1118
    %v1197 = vunpack.c.l.b16 %v1119
    %v1198 = vunpack.c.l.b16 %v1120
    %v1199 = vunpack.c.h.b16 %v1120
    %v1200 = vunpack.c.l.b16 %v1121
    %v1201 = vunpack.c.l.b16 %v1122
    %v1202 = vunpack.c.h.b16 %v1122
    %v1203 = vunpack.c.l.b16 %v1123
    %v1204 = vunpack.c.l.b16 %v1124
    %v1205 = vunpack.c.h.b16 %v1124
    %v1206 = vunpack.c.l.b16 %v1125
    %v1207 = vunpack.c.l.b16 %v1126
    %v1208 = vunpack.c.h.b16 %v1126
    %v1209 = vunpack.c.l.b16 %v1127
    %v1210 = vunpack.c.l.b16 %v1128
    %v1211 = vunpack.c.h.b16 %v1128
    %v1212 = vunpack.c.l.b16 %v1129
    %v1213 = vunpack.c.l.b16 %v1130
    %v1214 = vunpack.c.h.b16 %v1130
    %v1215 = vunpack.c.l.b16 %v1131
    %v1216 = vunpack.c.l.b16 %v1132
    %v1217 = vunpack.c.h.b16 %v1132
    %v1218 = vunpack.c.l.b16 %v1133
    %v1219 = vunpack.c.l.b16 %v1134
    %v1220 = vunpack.c.h.b16 %v1134
    %v1221 = vunpack.c.l.b16 %v1135
    %v1222 = vunpack.c.l.b16 %v1136
    %v1223 = vunpack.c.h.b16 %v1136
    %v1224 = vunpack.c.l.b16 %v1137
    %v1225 = vunpack.c.l.b16 %v1138
    %v1226 = vunpack.c.h.b16 %v1138
    %v1227 = vunpack.c.l.b16 %v1139
    %v1228 = vpack.c.b16 %v1183, %v1180
    %v1229 = vpack.c.b16 %v1184, %v1181
    %v1230 = vpack.c.b16 %v1185, %v1182
    %v1231 = vpack.c.b16 %v1189, %v1186
    %v1232 = vpack.c.b16 %v1190, %v1187
    %v1233 = vpack.c.b16 %v1191, %v1188
    %v1234 = vpack.c.b16 %v1195, %v1192
    %v1235 = vpack.c.b16 %v1196, %v1193
    %v1236 = vpack.c.b16 %v1197, %v1194
    %v1237 = vpack.c.b16 %v1201, %v1198
    %v1238 = vpack.c.b16 %v1202, %v1199
    %v1239 = vpack.c.b16 %v1203, %v1200
    %v1240 = vpack.c.b16 %v1207, %v1204
    %v1241 = vpack.c.b16 %v1208, %v1205
    %v1242 = vpack.c.b16 %v1209, %v1206
    %v1243 = vpack.c.b16 %v1213, %v1210
    %v1244 = vpack.c.b16 %v1214, %v1211
    %v1245 = vpack.c.b16 %v1215, %v1212
    %v1246 = vpack.c.b16 %v1219, %v1216
    %v1247 = vpack.c.b16 %v1220, %v1217
    %v1248 = vpack.c.b16 %v1221, %v1218
    %v1249 = vpack.c.b16 %v1225, %v1222
    %v1250 = vpack.c.b16 %v1226, %v1223
    %v1251 = vpack.c.b16 %v1227, %v1224
    %1276 = vmatpush.bf16.msra.mxu0 %v1249
    %1277 = vmatpush.bf16.msra.mxu0 %v1246
    %1278 = vmatpush.bf16.msra.mxu0 %v1243
    %1279 = vmatpush.bf16.msra.mxu0 %v1240
    %1280 = vmatpush.bf16.msra.mxu0 %v1237
    %1281 = vmatpush.bf16.msra.mxu0 %v1234
    %1282 = vmatpush.bf16.msra.mxu0 %v1231
    %1283 = vmatpush.bf16.msra.mxu0 %v1228
    %1284 = vmatmul.bf16.gmra.mxu0 %v1104
    %v1285 = vpop.f32.mrf.mxu0
    %v1286 = vadd.f32 %v1142, %v1285
    %v1287 = vpop.f32.mrf.mxu0
    %v1288 = vadd.f32 %v1142, %v1287
    %1289 = vmatmul.bf16.gmra.mxu0 %v1105
    %v1290 = vpop.f32.mrf.mxu0
    %v1291 = vadd.f32 %v1142, %v1290
    %v1292 = vpop.f32.mrf.mxu0
    %v1293 = vadd.f32 %v1142, %v1292
    %1294 = vmatmul.bf16.gmra.mxu0 %v1106
    %v1295 = vpop.f32.mrf.mxu0
    %v1296 = vadd.f32 %v1142, %v1295
    %v1297 = vpop.f32.mrf.mxu0
    %v1298 = vadd.f32 %v1142, %v1297
    %1299 = vmatmul.bf16.gmra.mxu0 %v1107
    %v1300 = vpop.f32.mrf.mxu0
    %v1301 = vadd.f32 %v1142, %v1300
    %v1302 = vpop.f32.mrf.mxu0
    %v1303 = vadd.f32 %v1142, %v1302
    %1304 = vdwg.mxu0
    %1305 = vmatpush.bf16.msra.mxu0 %v1250
    %1306 = vmatpush.bf16.msra.mxu0 %v1247
    %1307 = vmatpush.bf16.msra.mxu0 %v1244
    %1308 = vmatpush.bf16.msra.mxu0 %v1241
    %1309 = vmatpush.bf16.msra.mxu0 %v1238
    %1310 = vmatpush.bf16.msra.mxu0 %v1235
    %1311 = vmatpush.bf16.msra.mxu0 %v1232
    %1312 = vmatpush.bf16.msra.mxu0 %v1229
    %1313 = vmatmul.bf16.gmra.mxu0 %v1104
    %v1314 = vpop.f32.mrf.mxu0
    %v1315 = vadd.f32 %v1143, %v1314
    %v1316 = vpop.f32.mrf.mxu0
    %v1317 = vadd.f32 %v1143, %v1316
    %1318 = vmatmul.bf16.gmra.mxu0 %v1105
    %v1319 = vpop.f32.mrf.mxu0
    %v1320 = vadd.f32 %v1143, %v1319
    %v1321 = vpop.f32.mrf.mxu0
    %v1322 = vadd.f32 %v1143, %v1321
    %1323 = vmatmul.bf16.gmra.mxu0 %v1106
    %v1324 = vpop.f32.mrf.mxu0
    %v1325 = vadd.f32 %v1143, %v1324
    %v1326 = vpop.f32.mrf.mxu0
    %v1327 = vadd.f32 %v1143, %v1326
    %1328 = vmatmul.bf16.gmra.mxu0 %v1107
    %v1329 = vpop.f32.mrf.mxu0
    %v1330 = vadd.f32 %v1143, %v1329
    %v1331 = vpop.f32.mrf.mxu0
    %v1332 = vadd.f32 %v1143, %v1331
    %1333 = vdwg.mxu0
    %1334 = vmatpush.bf16.msra.mxu0 %v1251
    %1335 = vmatpush.bf16.msra.mxu0 %v1248
    %1336 = vmatpush.bf16.msra.mxu0 %v1245
    %1337 = vmatpush.bf16.msra.mxu0 %v1242
    %1338 = vmatpush.bf16.msra.mxu0 %v1239
    %1339 = vmatpush.bf16.msra.mxu0 %v1236
    %1340 = vmatpush.bf16.msra.mxu0 %v1233
    %1341 = vmatpush.bf16.msra.mxu0 %v1230
    %1342 = vmatmul.bf16.gmra.mxu0 %v1104
    %v1343 = vpop.f32.mrf.mxu0
    %v1344 = vadd.f32 %v1144, %v1343
    %v1345 = vpop.f32.mrf.mxu0
    %v1346 = vadd.f32 %v1144, %v1345
    %1347 = vmatmul.bf16.gmra.mxu0 %v1105
    %v1348 = vpop.f32.mrf.mxu0
    %v1349 = vadd.f32 %v1144, %v1348
    %v1350 = vpop.f32.mrf.mxu0
    %v1351 = vadd.f32 %v1144, %v1350
    %1352 = vmatmul.bf16.gmra.mxu0 %v1106
    %v1353 = vpop.f32.mrf.mxu0
    %v1354 = vadd.f32 %v1144, %v1353
    %v1355 = vpop.f32.mrf.mxu0
    %v1356 = vadd.f32 %v1144, %v1355
    %1357 = vmatmul.bf16.gmra.mxu0 %v1107
    %v1358 = vpop.f32.mrf.mxu0
    %v1359 = vadd.f32 %v1144, %v1358
    %v1360 = vpop.f32.mrf.mxu0
    %v1361 = vadd.f32 %v1144, %v1360
    %1362 = vdwg.mxu0
    %1363 = vst [vmem:[#allocation2] sm:$0xff] %v1286
    %1364 = vst [vmem:[#allocation2 + $0x8] sm:$0xff] %v1315
    %1365 = vst [vmem:[#allocation2 + $0x10] sm:$0xff] %v1344
    %1366 = vst [vmem:[#allocation2 + $0x18] sm:$0xff] %v1288
    %1367 = vst [vmem:[#allocation2 + $0x20] sm:$0xff] %v1317
    %1368 = vst [vmem:[#allocation2 + $0x28] sm:$0xff] %v1346
    %1369 = vst [vmem:[#allocation2 + $0x30] sm:$0xff] %v1291
    %1370 = vst [vmem:[#allocation2 + $0x38] sm:$0xff] %v1320
    %1371 = vst [vmem:[#allocation2 + $0x40] sm:$0xff] %v1349
    %1372 = vst [vmem:[#allocation2 + $0x48] sm:$0xff] %v1293
    %1373 = vst [vmem:[#allocation2 + $0x50] sm:$0xff] %v1322
    %1374 = vst [vmem:[#allocation2 + $0x58] sm:$0xff] %v1351
    %1375 = vst [vmem:[#allocation2 + $0x60] sm:$0xff] %v1296
    %1376 = vst [vmem:[#allocation2 + $0x68] sm:$0xff] %v1325
    %1377 = vst [vmem:[#allocation2 + $0x70] sm:$0xff] %v1354
    %1378 = vst [vmem:[#allocation2 + $0x78] sm:$0xff] %v1298
    %1379 = vst [vmem:[#allocation2 + $0x80] sm:$0xff] %v1327
    %1380 = vst [vmem:[#allocation2 + $0x88] sm:$0xff] %v1356
    %1381 = vst [vmem:[#allocation2 + $0x90] sm:$0xff] %v1301
    %1382 = vst [vmem:[#allocation2 + $0x98] sm:$0xff] %v1330
    %1383 = vst [vmem:[#allocation2 + $0xa0] sm:$0xff] %v1359
    %1384 = vst [vmem:[#allocation2 + $0xa8] sm:$0xff] %v1303
    %1385 = vst [vmem:[#allocation2 + $0xb0] sm:$0xff] %v1332
    %1386 = vst [vmem:[#allocation2 + $0xb8] sm:$0xff] %v1361
    %v1387 = vld [vmem:[#allocation9] sm:$0xff]
    %v1388 = vld [vmem:[#allocation9 + $0x8] sm:$0xf]
    %v1389 = vld [vmem:[#allocation9 + $0xc] sm:$0xff]
    %v1390 = vld [vmem:[#allocation9 + $0x14] sm:$0xf]
    %v1391 = vld [vmem:[#allocation9 + $0x18] sm:$0xff]
    %v1392 = vld [vmem:[#allocation9 + $0x20] sm:$0xf]
    %v1393 = vld [vmem:[#allocation9 + $0x24] sm:$0xff]
    %v1394 = vld [vmem:[#allocation9 + $0x2c] sm:$0xf]
    %v1395 = vld [vmem:[#allocation9 + $0x30] sm:$0xff]
    %v1396 = vld [vmem:[#allocation9 + $0x38] sm:$0xf]
    %v1397 = vld [vmem:[#allocation9 + $0x3c] sm:$0xff]
    %v1398 = vld [vmem:[#allocation9 + $0x44] sm:$0xf]
    %v1399 = vld [vmem:[#allocation9 + $0x48] sm:$0xff]
    %v1400 = vld [vmem:[#allocation9 + $0x50] sm:$0xf]
    %v1401 = vld [vmem:[#allocation9 + $0x54] sm:$0xff]
    %v1402 = vld [vmem:[#allocation9 + $0x5c] sm:$0xf]
    %v1403 = vld [vmem:[#allocation9 + $0x60] sm:$0xff]
    %v1404 = vld [vmem:[#allocation9 + $0x68] sm:$0xf]
    %v1405 = vld [vmem:[#allocation9 + $0x6c] sm:$0xff]
    %v1406 = vld [vmem:[#allocation9 + $0x74] sm:$0xf]
    %v1407 = vld [vmem:[#allocation9 + $0x78] sm:$0xff]
    %v1408 = vld [vmem:[#allocation9 + $0x80] sm:$0xf]
    %v1409 = vld [vmem:[#allocation9 + $0x84] sm:$0xff]
    %v1410 = vld [vmem:[#allocation9 + $0x8c] sm:$0xf]
    %v1411 = vld [vmem:[#allocation9 + $0x90] sm:$0xff]
    %v1412 = vld [vmem:[#allocation9 + $0x98] sm:$0xf]
    %v1413 = vld [vmem:[#allocation9 + $0x9c] sm:$0xff]
    %v1414 = vld [vmem:[#allocation9 + $0xa4] sm:$0xf]
    %v1415 = vld [vmem:[#allocation9 + $0xa8] sm:$0xff]
    %v1416 = vld [vmem:[#allocation9 + $0xb0] sm:$0xf]
    %v1417 = vld [vmem:[#allocation9 + $0xb4] sm:$0xff]
    %v1418 = vld [vmem:[#allocation9 + $0xbc] sm:$0xf]
    %v1419 = vld [vmem:[%s8] sm:$0x1]
    %v1421 = vperm.slane %v1419, 0
    %v1423 = vld [vmem:[#allocation2] sm:$0xff]
    %v1424 = vld [vmem:[#allocation2 + $0x8] sm:$0xff]
    %v1425 = vld [vmem:[#allocation2 + $0x10] sm:$0xff]
    %v1458 = vunpack.c.l.b16 %v1387
    %v1459 = vunpack.c.h.b16 %v1387
    %v1460 = vunpack.c.l.b16 %v1388
    %v1461 = vunpack.c.l.b16 %v1389
    %v1462 = vunpack.c.h.b16 %v1389
    %v1463 = vunpack.c.l.b16 %v1390
    %v1464 = vunpack.c.l.b16 %v1391
    %v1465 = vunpack.c.h.b16 %v1391
    %v1466 = vunpack.c.l.b16 %v1392
    %v1467 = vunpack.c.l.b16 %v1393
    %v1468 = vunpack.c.h.b16 %v1393
    %v1469 = vunpack.c.l.b16 %v1394
    %v1470 = vunpack.c.l.b16 %v1395
    %v1471 = vunpack.c.h.b16 %v1395
    %v1472 = vunpack.c.l.b16 %v1396
    %v1473 = vunpack.c.l.b16 %v1397
    %v1474 = vunpack.c.h.b16 %v1397
    %v1475 = vunpack.c.l.b16 %v1398
    %v1476 = vunpack.c.l.b16 %v1399
    %v1477 = vunpack.c.h.b16 %v1399
    %v1478 = vunpack.c.l.b16 %v1400
    %v1479 = vunpack.c.l.b16 %v1401
    %v1480 = vunpack.c.h.b16 %v1401
    %v1481 = vunpack.c.l.b16 %v1402
    %v1482 = vunpack.c.l.b16 %v1403
    %v1483 = vunpack.c.h.b16 %v1403
    %v1484 = vunpack.c.l.b16 %v1404
    %v1485 = vunpack.c.l.b16 %v1405
    %v1486 = vunpack.c.h.b16 %v1405
    %v1487 = vunpack.c.l.b16 %v1406
    %v1488 = vunpack.c.l.b16 %v1407
    %v1489 = vunpack.c.h.b16 %v1407
    %v1490 = vunpack.c.l.b16 %v1408
    %v1491 = vunpack.c.l.b16 %v1409
    %v1492 = vunpack.c.h.b16 %v1409
    %v1493 = vunpack.c.l.b16 %v1410
    %v1494 = vunpack.c.l.b16 %v1411
    %v1495 = vunpack.c.h.b16 %v1411
    %v1496 = vunpack.c.l.b16 %v1412
    %v1497 = vunpack.c.l.b16 %v1413
    %v1498 = vunpack.c.h.b16 %v1413
    %v1499 = vunpack.c.l.b16 %v1414
    %v1500 = vunpack.c.l.b16 %v1415
    %v1501 = vunpack.c.h.b16 %v1415
    %v1502 = vunpack.c.l.b16 %v1416
    %v1503 = vunpack.c.l.b16 %v1417
    %v1504 = vunpack.c.h.b16 %v1417
    %v1505 = vunpack.c.l.b16 %v1418
    %v1506 = vpack.c.b16 %v1461, %v1458
    %v1507 = vpack.c.b16 %v1462, %v1459
    %v1508 = vpack.c.b16 %v1463, %v1460
    %v1509 = vpack.c.b16 %v1467, %v1464
    %v1510 = vpack.c.b16 %v1468, %v1465
    %v1511 = vpack.c.b16 %v1469, %v1466
    %v1512 = vpack.c.b16 %v1473, %v1470
    %v1513 = vpack.c.b16 %v1474, %v1471
    %v1514 = vpack.c.b16 %v1475, %v1472
    %v1515 = vpack.c.b16 %v1479, %v1476
    %v1516 = vpack.c.b16 %v1480, %v1477
    %v1517 = vpack.c.b16 %v1481, %v1478
    %v1518 = vpack.c.b16 %v1485, %v1482
    %v1519 = vpack.c.b16 %v1486, %v1483
    %v1520 = vpack.c.b16 %v1487, %v1484
    %v1521 = vpack.c.b16 %v1491, %v1488
    %v1522 = vpack.c.b16 %v1492, %v1489
    %v1523 = vpack.c.b16 %v1493, %v1490
    %v1524 = vpack.c.b16 %v1497, %v1494
    %v1525 = vpack.c.b16 %v1498, %v1495
    %v1526 = vpack.c.b16 %v1499, %v1496
    %v1527 = vpack.c.b16 %v1503, %v1500
    %v1528 = vpack.c.b16 %v1504, %v1501
    %v1529 = vpack.c.b16 %v1505, %v1502
    %1554 = vmatpush.bf16.msra.mxu0 %v1527
    %1555 = vmatpush.bf16.msra.mxu0 %v1524
    %1556 = vmatpush.bf16.msra.mxu0 %v1521
    %1557 = vmatpush.bf16.msra.mxu0 %v1518
    %1558 = vmatpush.bf16.msra.mxu0 %v1515
    %1559 = vmatpush.bf16.msra.mxu0 %v1512
    %1560 = vmatpush.bf16.msra.mxu0 %v1509
    %1561 = vmatpush.bf16.msra.mxu0 %v1506
    %1562 = vmatmul.bf16.gmra.mxu0 0
    %v1563 = vpop.f32.mrf.mxu0
    %v1564 = vadd.f32 0.0, %v1563
    %v1565 = vpop.f32.mrf.mxu0
    %1566 = vdwg.mxu0
    %1567 = vmatpush.bf16.msra.mxu0 %v1528
    %1568 = vmatpush.bf16.msra.mxu0 %v1525
    %1569 = vmatpush.bf16.msra.mxu0 %v1522
    %1570 = vmatpush.bf16.msra.mxu0 %v1519
    %1571 = vmatpush.bf16.msra.mxu0 %v1516
    %1572 = vmatpush.bf16.msra.mxu0 %v1513
    %1573 = vmatpush.bf16.msra.mxu0 %v1510
    %1574 = vmatpush.bf16.msra.mxu0 %v1507
    %1575 = vmatmul.bf16.gmra.mxu0 0
    %v1576 = vpop.f32.mrf.mxu0
    %v1577 = vadd.f32 0.0, %v1576
    %v1578 = vpop.f32.mrf.mxu0
    %1579 = vdwg.mxu0
    %1580 = vmatpush.bf16.msra.mxu0 %v1529
    %1581 = vmatpush.bf16.msra.mxu0 %v1526
    %1582 = vmatpush.bf16.msra.mxu0 %v1523
    %1583 = vmatpush.bf16.msra.mxu0 %v1520
    %1584 = vmatpush.bf16.msra.mxu0 %v1517
    %1585 = vmatpush.bf16.msra.mxu0 %v1514
    %1586 = vmatpush.bf16.msra.mxu0 %v1511
    %1587 = vmatpush.bf16.msra.mxu0 %v1508
    %1588 = vmatmul.bf16.gmra.mxu0 0
    %v1589 = vpop.f32.mrf.mxu0
    %v1590 = vadd.f32 0.0, %v1589
    %v1591 = vpop.f32.mrf.mxu0
    %1592 = vdwg.mxu0
    %v1593 = vadd.f32 %v1423, %v1564
    %v1594 = vadd.f32 %v1424, %v1577
    %v1595 = vsub.f32 0.0, %v1593
    %v1596 = vsub.f32 0.0, %v1594
    %v1597 = vmul.f32 %v1595, 1.442695
    %v1598 = vpow.pop %v1597
    %v1599 = vmul.f32 %v1596, 1.442695
    %v1600 = vpow.pop %v1599
    %v1601 = vadd.f32 %v1598, 1.0
    %v1602 = vadd.f32 %v1600, 1.0
    %v1603 = vrcp.pop %v1601
    %v1604 = vrcp.pop %v1602
    %v1605 = vadd.f32 %v1590, %v1421
    %v1606 = vmul.f32 %v1603, %v1605
    %v1607 = vadd.f32 %v1425, %v1606
    %v1608 = vtanh.pop %v1607
    %v1609 = vsub.f32 1.0, %v1604
    %v1610 = vmul.f32 %v1609, %v1608
    %v1611 = vmul.f32 %v1604, 0.0
    %v1612 = vadd.f32 %v1610, %v1611
    %v1613 = vld [vmem:[%s634] sm:$0xff]
    %v1614 = vld [vmem:[%s634 + $0x8] sm:$0xff]
    %v1615 = vld [vmem:[%s634 + $0x10] sm:$0xff]
    %v1616 = vpack.c.bf16 %v1612, %v1612
    %1617 = vmatpush.bf16.msra.mxu0 %v1527
    %1618 = vmatpush.bf16.msra.mxu0 %v1524
    %1619 = vmatpush.bf16.msra.mxu0 %v1521
    %1620 = vmatpush.bf16.msra.mxu0 %v1518
    %1621 = vmatpush.bf16.msra.mxu0 %v1515
    %1622 = vmatpush.bf16.msra.mxu0 %v1512
    %1623 = vmatpush.bf16.msra.mxu0 %v1509
    %1624 = vmatpush.bf16.msra.mxu0 %v1506
    %1625 = vmatmul.bf16.gmra.mxu0 %v1616
    %v1626 = vpop.f32.mrf.mxu0
    %v1627 = vadd.f32 0.0, %v1626
    %v1628 = vpop.f32.mrf.mxu0
    %1629 = vdwg.mxu0
    %1630 = vmatpush.bf16.msra.mxu0 %v1528
    %1631 = vmatpush.bf16.msra.mxu0 %v1525
    %1632 = vmatpush.bf16.msra.mxu0 %v1522
    %1633 = vmatpush.bf16.msra.mxu0 %v1519
    %1634 = vmatpush.bf16.msra.mxu0 %v1516
    %1635 = vmatpush.bf16.msra.mxu0 %v1513
    %1636 = vmatpush.bf16.msra.mxu0 %v1510
    %1637 = vmatpush.bf16.msra.mxu0 %v1507
    %1638 = vmatmul.bf16.gmra.mxu0 %v1616
    %v1639 = vpop.f32.mrf.mxu0
    %v1640 = vadd.f32 0.0, %v1639
    %v1641 = vpop.f32.mrf.mxu0
    %1642 = vdwg.mxu0
    %1643 = vmatpush.bf16.msra.mxu0 %v1529
    %1644 = vmatpush.bf16.msra.mxu0 %v1526
    %1645 = vmatpush.bf16.msra.mxu0 %v1523
    %1646 = vmatpush.bf16.msra.mxu0 %v1520
    %1647 = vmatpush.bf16.msra.mxu0 %v1517
    %1648 = vmatpush.bf16.msra.mxu0 %v1514
    %1649 = vmatpush.bf16.msra.mxu0 %v1511
    %1650 = vmatpush.bf16.msra.mxu0 %v1508
    %1651 = vmatmul.bf16.gmra.mxu0 %v1616
    %v1652 = vpop.f32.mrf.mxu0
    %v1653 = vadd.f32 0.0, %v1652
    %v1654 = vpop.f32.mrf.mxu0
    %1655 = vdwg.mxu0
    %v1656 = vadd.f32 %v1613, %v1627
    %v1657 = vadd.f32 %v1614, %v1640
    %v1658 = vsub.f32 0.0, %v1656
    %v1659 = vsub.f32 0.0, %v1657
    %v1660 = vmul.f32 %v1658, 1.442695
    %v1661 = vpow.pop %v1660
    %v1662 = vmul.f32 %v1659, 1.442695
    %v1663 = vpow.pop %v1662
    %v1664 = vadd.f32 %v1661, 1.0
    %v1665 = vadd.f32 %v1663, 1.0
    %v1666 = vrcp.pop %v1664
    %v1667 = vrcp.pop %v1665
    %v1668 = vadd.f32 %v1653, %v1421
    %v1669 = vmul.f32 %v1666, %v1668
    %v1670 = vadd.f32 %v1615, %v1669
    %v1671 = vtanh.pop %v1670
    %v1672 = vsub.f32 1.0, %v1667
    %v1673 = vmul.f32 %v1672, %v1671
    %v1674 = vmul.f32 %v1667, %v1612
    %v1675 = vadd.f32 %v1673, %v1674
    %v1676 = vld [vmem:[%s700] sm:$0xff]
    %v1677 = vld [vmem:[%s700 + $0x8] sm:$0xff]
    %v1678 = vld [vmem:[%s700 + $0x10] sm:$0xff]
    %v1679 = vpack.c.bf16 %v1675, %v1675
    %1680 = vmatpush.bf16.msra.mxu0 %v1527
    %1681 = vmatpush.bf16.msra.mxu0 %v1524
    %1682 = vmatpush.bf16.msra.mxu0 %v1521
    %1683 = vmatpush.bf16.msra.mxu0 %v1518
    %1684 = vmatpush.bf16.msra.mxu0 %v1515
    %1685 = vmatpush.bf16.msra.mxu0 %v1512
    %1686 = vmatpush.bf16.msra.mxu0 %v1509
    %1687 = vmatpush.bf16.msra.mxu0 %v1506
    %1688 = vmatmul.bf16.gmra.mxu0 %v1679
    %v1689 = vpop.f32.mrf.mxu0
    %v1690 = vadd.f32 0.0, %v1689
    %v1691 = vpop.f32.mrf.mxu0
    %1692 = vdwg.mxu0
    %1693 = vmatpush.bf16.msra.mxu0 %v1528
    %1694 = vmatpush.bf16.msra.mxu0 %v1525
    %1695 = vmatpush.bf16.msra.mxu0 %v1522
    %1696 = vmatpush.bf16.msra.mxu0 %v1519
    %1697 = vmatpush.bf16.msra.mxu0 %v1516
    %1698 = vmatpush.bf16.msra.mxu0 %v1513
    %1699 = vmatpush.bf16.msra.mxu0 %v1510
    %1700 = vmatpush.bf16.msra.mxu0 %v1507
    %1701 = vmatmul.bf16.gmra.mxu0 %v1679
    %v1702 = vpop.f32.mrf.mxu0
    %v1703 = vadd.f32 0.0, %v1702
    %v1704 = vpop.f32.mrf.mxu0
    %1705 = vdwg.mxu0
    %1706 = vmatpush.bf16.msra.mxu0 %v1529
    %1707 = vmatpush.bf16.msra.mxu0 %v1526
    %1708 = vmatpush.bf16.msra.mxu0 %v1523
    %1709 = vmatpush.bf16.msra.mxu0 %v1520
    %1710 = vmatpush.bf16.msra.mxu0 %v1517
    %1711 = vmatpush.bf16.msra.mxu0 %v1514
    %1712 = vmatpush.bf16.msra.mxu0 %v1511
    %1713 = vmatpush.bf16.msra.mxu0 %v1508
    %1714 = vmatmul.bf16.gmra.mxu0 %v1679
    %v1715 = vpop.f32.mrf.mxu0
    %v1716 = vadd.f32 0.0, %v1715
    %v1717 = vpop.f32.mrf.mxu0
    %1718 = vdwg.mxu0
    %v1719 = vadd.f32 %v1676, %v1690
    %v1720 = vadd.f32 %v1677, %v1703
    %v1721 = vsub.f32 0.0, %v1719
    %v1722 = vsub.f32 0.0, %v1720
    %v1723 = vmul.f32 %v1721, 1.442695
    %v1724 = vpow.pop %v1723
    %v1725 = vmul.f32 %v1722, 1.442695
    %v1726 = vpow.pop %v1725
    %v1727 = vadd.f32 %v1724, 1.0
    %v1728 = vadd.f32 %v1726, 1.0
    %v1729 = vrcp.pop %v1727
    %v1730 = vrcp.pop %v1728
    %v1731 = vadd.f32 %v1716, %v1421
    %v1732 = vmul.f32 %v1729, %v1731
    %v1733 = vadd.f32 %v1678, %v1732
    %v1734 = vtanh.pop %v1733
    %v1735 = vsub.f32 1.0, %v1730
    %v1736 = vmul.f32 %v1735, %v1734
    %v1737 = vmul.f32 %v1730, %v1675
    %v1738 = vadd.f32 %v1736, %v1737
    %v1739 = vld [vmem:[%s766] sm:$0xff]
    %v1740 = vld [vmem:[%s766 + $0x8] sm:$0xff]
    %v1741 = vld [vmem:[%s766 + $0x10] sm:$0xff]
    %v1742 = vpack.c.bf16 %v1738, %v1738
    %1743 = vmatpush.bf16.msra.mxu0 %v1527
    %1744 = vmatpush.bf16.msra.mxu0 %v1524
    %1745 = vmatpush.bf16.msra.mxu0 %v1521
    %1746 = vmatpush.bf16.msra.mxu0 %v1518
    %1747 = vmatpush.bf16.msra.mxu0 %v1515
    %1748 = vmatpush.bf16.msra.mxu0 %v1512
    %1749 = vmatpush.bf16.msra.mxu0 %v1509
    %1750 = vmatpush.bf16.msra.mxu0 %v1506
    %1751 = vmatmul.bf16.gmra.mxu0 %v1742
    %v1752 = vpop.f32.mrf.mxu0
    %v1753 = vadd.f32 0.0, %v1752
    %v1754 = vpop.f32.mrf.mxu0
    %1755 = vdwg.mxu0
    %1756 = vmatpush.bf16.msra.mxu0 %v1528
    %1757 = vmatpush.bf16.msra.mxu0 %v1525
    %1758 = vmatpush.bf16.msra.mxu0 %v1522
    %1759 = vmatpush.bf16.msra.mxu0 %v1519
    %1760 = vmatpush.bf16.msra.mxu0 %v1516
    %1761 = vmatpush.bf16.msra.mxu0 %v1513
    %1762 = vmatpush.bf16.msra.mxu0 %v1510
    %1763 = vmatpush.bf16.msra.mxu0 %v1507
    %1764 = vmatmul.bf16.gmra.mxu0 %v1742
    %v1765 = vpop.f32.mrf.mxu0
    %v1766 = vadd.f32 0.0, %v1765
    %v1767 = vpop.f32.mrf.mxu0
    %1768 = vdwg.mxu0
    %1769 = vmatpush.bf16.msra.mxu0 %v1529
    %1770 = vmatpush.bf16.msra.mxu0 %v1526
    %1771 = vmatpush.bf16.msra.mxu0 %v1523
    %1772 = vmatpush.bf16.msra.mxu0 %v1520
    %1773 = vmatpush.bf16.msra.mxu0 %v1517
    %1774 = vmatpush.bf16.msra.mxu0 %v1514
    %1775 = vmatpush.bf16.msra.mxu0 %v1511
    %1776 = vmatpush.bf16.msra.mxu0 %v1508
    %1777 = vmatmul.bf16.gmra.mxu0 %v1742
    %v1778 = vpop.f32.mrf.mxu0
    %v1779 = vadd.f32 0.0, %v1778
    %v1780 = vpop.f32.mrf.mxu0
    %1781 = vdwg.mxu0
    %v1782 = vadd.f32 %v1739, %v1753
    %v1783 = vadd.f32 %v1740, %v1766
    %v1784 = vsub.f32 0.0, %v1782
    %v1785 = vsub.f32 0.0, %v1783
    %v1786 = vmul.f32 %v1784, 1.442695
    %v1787 = vpow.pop %v1786
    %v1788 = vmul.f32 %v1785, 1.442695
    %v1789 = vpow.pop %v1788
    %v1790 = vadd.f32 %v1787, 1.0
    %v1791 = vadd.f32 %v1789, 1.0
    %v1792 = vrcp.pop %v1790
    %v1793 = vrcp.pop %v1791
    %v1794 = vadd.f32 %v1779, %v1421
    %v1795 = vmul.f32 %v1792, %v1794
    %v1796 = vadd.f32 %v1741, %v1795
    %v1797 = vtanh.pop %v1796
    %v1798 = vsub.f32 1.0, %v1793
    %v1799 = vmul.f32 %v1798, %v1797
    %v1800 = vmul.f32 %v1793, %v1738
    %v1801 = vadd.f32 %v1799, %v1800
    %v1802 = vld [vmem:[%s832] sm:$0xff]
    %v1803 = vld [vmem:[%s832 + $0x8] sm:$0xff]
    %v1804 = vld [vmem:[%s832 + $0x10] sm:$0xff]
    %v1805 = vpack.c.bf16 %v1801, %v1801
    %1806 = vmatpush.bf16.msra.mxu0 %v1527
    %1807 = vmatpush.bf16.msra.mxu0 %v1524
    %1808 = vmatpush.bf16.msra.mxu0 %v1521
    %1809 = vmatpush.bf16.msra.mxu0 %v1518
    %1810 = vmatpush.bf16.msra.mxu0 %v1515
    %1811 = vmatpush.bf16.msra.mxu0 %v1512
    %1812 = vmatpush.bf16.msra.mxu0 %v1509
    %1813 = vmatpush.bf16.msra.mxu0 %v1506
    %1814 = vmatmul.bf16.gmra.mxu0 %v1805
    %v1815 = vpop.f32.mrf.mxu0
    %v1816 = vadd.f32 0.0, %v1815
    %v1817 = vpop.f32.mrf.mxu0
    %1818 = vdwg.mxu0
    %1819 = vmatpush.bf16.msra.mxu0 %v1528
    %1820 = vmatpush.bf16.msra.mxu0 %v1525
    %1821 = vmatpush.bf16.msra.mxu0 %v1522
    %1822 = vmatpush.bf16.msra.mxu0 %v1519
    %1823 = vmatpush.bf16.msra.mxu0 %v1516
    %1824 = vmatpush.bf16.msra.mxu0 %v1513
    %1825 = vmatpush.bf16.msra.mxu0 %v1510
    %1826 = vmatpush.bf16.msra.mxu0 %v1507
    %1827 = vmatmul.bf16.gmra.mxu0 %v1805
    %v1828 = vpop.f32.mrf.mxu0
    %v1829 = vadd.f32 0.0, %v1828
    %v1830 = vpop.f32.mrf.mxu0
    %1831 = vdwg.mxu0
    %1832 = vmatpush.bf16.msra.mxu0 %v1529
    %1833 = vmatpush.bf16.msra.mxu0 %v1526
    %1834 = vmatpush.bf16.msra.mxu0 %v1523
    %1835 = vmatpush.bf16.msra.mxu0 %v1520
    %1836 = vmatpush.bf16.msra.mxu0 %v1517
    %1837 = vmatpush.bf16.msra.mxu0 %v1514
    %1838 = vmatpush.bf16.msra.mxu0 %v1511
    %1839 = vmatpush.bf16.msra.mxu0 %v1508
    %1840 = vmatmul.bf16.gmra.mxu0 %v1805
    %v1841 = vpop.f32.mrf.mxu0
    %v1842 = vadd.f32 0.0, %v1841
    %v1843 = vpop.f32.mrf.mxu0
    %1844 = vdwg.mxu0
    %v1845 = vadd.f32 %v1802, %v1816
    %v1846 = vadd.f32 %v1803, %v1829
    %v1847 = vsub.f32 0.0, %v1845
    %v1848 = vsub.f32 0.0, %v1846
    %v1849 = vmul.f32 %v1847, 1.442695
    %v1850 = vpow.pop %v1849
    %v1851 = vmul.f32 %v1848, 1.442695
    %v1852 = vpow.pop %v1851
    %v1853 = vadd.f32 %v1850, 1.0
    %v1854 = vadd.f32 %v1852, 1.0
    %v1855 = vrcp.pop %v1853
    %v1856 = vrcp.pop %v1854
    %v1857 = vadd.f32 %v1842, %v1421
    %v1858 = vmul.f32 %v1855, %v1857
    %v1859 = vadd.f32 %v1804, %v1858
    %v1860 = vtanh.pop %v1859
    %v1861 = vsub.f32 1.0, %v1856
    %v1862 = vmul.f32 %v1861, %v1860
    %v1863 = vmul.f32 %v1856, %v1801
    %v1864 = vadd.f32 %v1862, %v1863
    %v1865 = vld [vmem:[%s898] sm:$0xff]
    %v1866 = vld [vmem:[%s898 + $0x8] sm:$0xff]
    %v1867 = vld [vmem:[%s898 + $0x10] sm:$0xff]
    %v1868 = vpack.c.bf16 %v1864, %v1864
    %1869 = vmatpush.bf16.msra.mxu0 %v1527
    %1870 = vmatpush.bf16.msra.mxu0 %v1524
    %1871 = vmatpush.bf16.msra.mxu0 %v1521
    %1872 = vmatpush.bf16.msra.mxu0 %v1518
    %1873 = vmatpush.bf16.msra.mxu0 %v1515
    %1874 = vmatpush.bf16.msra.mxu0 %v1512
    %1875 = vmatpush.bf16.msra.mxu0 %v1509
    %1876 = vmatpush.bf16.msra.mxu0 %v1506
    %1877 = vmatmul.bf16.gmra.mxu0 %v1868
    %v1878 = vpop.f32.mrf.mxu0
    %v1879 = vadd.f32 0.0, %v1878
    %v1880 = vpop.f32.mrf.mxu0
    %1881 = vdwg.mxu0
    %1882 = vmatpush.bf16.msra.mxu0 %v1528
    %1883 = vmatpush.bf16.msra.mxu0 %v1525
    %1884 = vmatpush.bf16.msra.mxu0 %v1522
    %1885 = vmatpush.bf16.msra.mxu0 %v1519
    %1886 = vmatpush.bf16.msra.mxu0 %v1516
    %1887 = vmatpush.bf16.msra.mxu0 %v1513
    %1888 = vmatpush.bf16.msra.mxu0 %v1510
    %1889 = vmatpush.bf16.msra.mxu0 %v1507
    %1890 = vmatmul.bf16.gmra.mxu0 %v1868
    %v1891 = vpop.f32.mrf.mxu0
    %v1892 = vadd.f32 0.0, %v1891
    %v1893 = vpop.f32.mrf.mxu0
    %1894 = vdwg.mxu0
    %1895 = vmatpush.bf16.msra.mxu0 %v1529
    %1896 = vmatpush.bf16.msra.mxu0 %v1526
    %1897 = vmatpush.bf16.msra.mxu0 %v1523
    %1898 = vmatpush.bf16.msra.mxu0 %v1520
    %1899 = vmatpush.bf16.msra.mxu0 %v1517
    %1900 = vmatpush.bf16.msra.mxu0 %v1514
    %1901 = vmatpush.bf16.msra.mxu0 %v1511
    %1902 = vmatpush.bf16.msra.mxu0 %v1508
    %1903 = vmatmul.bf16.gmra.mxu0 %v1868
    %v1904 = vpop.f32.mrf.mxu0
    %v1905 = vadd.f32 0.0, %v1904
    %v1906 = vpop.f32.mrf.mxu0
    %1907 = vdwg.mxu0
    %v1908 = vadd.f32 %v1865, %v1879
    %v1909 = vadd.f32 %v1866, %v1892
    %v1910 = vsub.f32 0.0, %v1908
    %v1911 = vsub.f32 0.0, %v1909
    %v1912 = vmul.f32 %v1910, 1.442695
    %v1913 = vpow.pop %v1912
    %v1914 = vmul.f32 %v1911, 1.442695
    %v1915 = vpow.pop %v1914
    %v1916 = vadd.f32 %v1913, 1.0
    %v1917 = vadd.f32 %v1915, 1.0
    %v1918 = vrcp.pop %v1916
    %v1919 = vrcp.pop %v1917
    %v1920 = vadd.f32 %v1905, %v1421
    %v1921 = vmul.f32 %v1918, %v1920
    %v1922 = vadd.f32 %v1867, %v1921
    %v1923 = vtanh.pop %v1922
    %v1924 = vsub.f32 1.0, %v1919
    %v1925 = vmul.f32 %v1924, %v1923
    %v1926 = vmul.f32 %v1919, %v1864
    %v1927 = vadd.f32 %v1925, %v1926
    %v1928 = vld [vmem:[%s964] sm:$0xff]
    %v1929 = vld [vmem:[%s964 + $0x8] sm:$0xff]
    %v1930 = vld [vmem:[%s964 + $0x10] sm:$0xff]
    %v1931 = vpack.c.bf16 %v1927, %v1927
    %1932 = vmatpush.bf16.msra.mxu0 %v1527
    %1933 = vmatpush.bf16.msra.mxu0 %v1524
    %1934 = vmatpush.bf16.msra.mxu0 %v1521
    %1935 = vmatpush.bf16.msra.mxu0 %v1518
    %1936 = vmatpush.bf16.msra.mxu0 %v1515
    %1937 = vmatpush.bf16.msra.mxu0 %v1512
    %1938 = vmatpush.bf16.msra.mxu0 %v1509
    %1939 = vmatpush.bf16.msra.mxu0 %v1506
    %1940 = vmatmul.bf16.gmra.mxu0 %v1931
    %v1941 = vpop.f32.mrf.mxu0
    %v1942 = vadd.f32 0.0, %v1941
    %v1943 = vpop.f32.mrf.mxu0
    %1944 = vdwg.mxu0
    %1945 = vmatpush.bf16.msra.mxu0 %v1528
    %1946 = vmatpush.bf16.msra.mxu0 %v1525
    %1947 = vmatpush.bf16.msra.mxu0 %v1522
    %1948 = vmatpush.bf16.msra.mxu0 %v1519
    %1949 = vmatpush.bf16.msra.mxu0 %v1516
    %1950 = vmatpush.bf16.msra.mxu0 %v1513
    %1951 = vmatpush.bf16.msra.mxu0 %v1510
    %1952 = vmatpush.bf16.msra.mxu0 %v1507
    %1953 = vmatmul.bf16.gmra.mxu0 %v1931
    %v1954 = vpop.f32.mrf.mxu0
    %v1955 = vadd.f32 0.0, %v1954
    %v1956 = vpop.f32.mrf.mxu0
    %1957 = vdwg.mxu0
    %1958 = vmatpush.bf16.msra.mxu0 %v1529
    %1959 = vmatpush.bf16.msra.mxu0 %v1526
    %1960 = vmatpush.bf16.msra.mxu0 %v1523
    %1961 = vmatpush.bf16.msra.mxu0 %v1520
    %1962 = vmatpush.bf16.msra.mxu0 %v1517
    %1963 = vmatpush.bf16.msra.mxu0 %v1514
    %1964 = vmatpush.bf16.msra.mxu0 %v1511
    %1965 = vmatpush.bf16.msra.mxu0 %v1508
    %1966 = vmatmul.bf16.gmra.mxu0 %v1931
    %v1967 = vpop.f32.mrf.mxu0
    %v1968 = vadd.f32 0.0, %v1967
    %v1969 = vpop.f32.mrf.mxu0
    %1970 = vdwg.mxu0
    %v1971 = vadd.f32 %v1928, %v1942
    %v1972 = vadd.f32 %v1929, %v1955
    %v1973 = vsub.f32 0.0, %v1971
    %v1974 = vsub.f32 0.0, %v1972
    %v1975 = vmul.f32 %v1973, 1.442695
    %v1976 = vpow.pop %v1975
    %v1977 = vmul.f32 %v1974, 1.442695
    %v1978 = vpow.pop %v1977
    %v1979 = vadd.f32 %v1976, 1.0
    %v1980 = vadd.f32 %v1978, 1.0
    %v1981 = vrcp.pop %v1979
    %v1982 = vrcp.pop %v1980
    %v1983 = vadd.f32 %v1968, %v1421
    %v1984 = vmul.f32 %v1981, %v1983
    %v1985 = vadd.f32 %v1930, %v1984
    %v1986 = vtanh.pop %v1985
    %v1987 = vsub.f32 1.0, %v1982
    %v1988 = vmul.f32 %v1987, %v1986
    %v1989 = vmul.f32 %v1982, %v1927
    %v1990 = vadd.f32 %v1988, %v1989
    %v1991 = vld [vmem:[%s1030] sm:$0xff]
    %v1992 = vld [vmem:[%s1030 + $0x8] sm:$0xff]
    %v1993 = vld [vmem:[%s1030 + $0x10] sm:$0xff]
    %v1994 = vpack.c.bf16 %v1990, %v1990
    %1995 = vmatpush.bf16.msra.mxu0 %v1527
    %1996 = vmatpush.bf16.msra.mxu0 %v1524
    %1997 = vmatpush.bf16.msra.mxu0 %v1521
    %1998 = vmatpush.bf16.msra.mxu0 %v1518
    %1999 = vmatpush.bf16.msra.mxu0 %v1515
    %2000 = vmatpush.bf16.msra.mxu0 %v1512
    %2001 = vmatpush.bf16.msra.mxu0 %v1509
    %2002 = vmatpush.bf16.msra.mxu0 %v1506
    %2003 = vmatmul.bf16.gmra.mxu0 %v1994
    %v2004 = vpop.f32.mrf.mxu0
    %v2005 = vadd.f32 0.0, %v2004
    %v2006 = vpop.f32.mrf.mxu0
    %2007 = vdwg.mxu0
    %2008 = vmatpush.bf16.msra.mxu0 %v1528
    %2009 = vmatpush.bf16.msra.mxu0 %v1525
    %2010 = vmatpush.bf16.msra.mxu0 %v1522
    %2011 = vmatpush.bf16.msra.mxu0 %v1519
    %2012 = vmatpush.bf16.msra.mxu0 %v1516
    %2013 = vmatpush.bf16.msra.mxu0 %v1513
    %2014 = vmatpush.bf16.msra.mxu0 %v1510
    %2015 = vmatpush.bf16.msra.mxu0 %v1507
    %2016 = vmatmul.bf16.gmra.mxu0 %v1994
    %v2017 = vpop.f32.mrf.mxu0
    %v2018 = vadd.f32 0.0, %v2017
    %v2019 = vpop.f32.mrf.mxu0
    %2020 = vdwg.mxu0
    %2021 = vmatpush.bf16.msra.mxu0 %v1529
    %2022 = vmatpush.bf16.msra.mxu0 %v1526
    %2023 = vmatpush.bf16.msra.mxu0 %v1523
    %2024 = vmatpush.bf16.msra.mxu0 %v1520
    %2025 = vmatpush.bf16.msra.mxu0 %v1517
    %2026 = vmatpush.bf16.msra.mxu0 %v1514
    %2027 = vmatpush.bf16.msra.mxu0 %v1511
    %2028 = vmatpush.bf16.msra.mxu0 %v1508
    %2029 = vmatmul.bf16.gmra.mxu0 %v1994
    %v2030 = vpop.f32.mrf.mxu0
    %v2031 = vadd.f32 0.0, %v2030
    %v2032 = vpop.f32.mrf.mxu0
    %2033 = vdwg.mxu0
    %v2034 = vadd.f32 %v1991, %v2005
    %v2035 = vadd.f32 %v1992, %v2018
    %v2036 = vsub.f32 0.0, %v2034
    %v2037 = vsub.f32 0.0, %v2035
    %v2038 = vmul.f32 %v2036, 1.442695
    %v2039 = vpow.pop %v2038
    %v2040 = vmul.f32 %v2037, 1.442695
    %v2041 = vpow.pop %v2040
    %v2042 = vadd.f32 %v2039, 1.0
    %v2043 = vadd.f32 %v2041, 1.0
    %v2044 = vrcp.pop %v2042
    %v2045 = vrcp.pop %v2043
    %v2046 = vadd.f32 %v2031, %v1421
    %v2047 = vmul.f32 %v2044, %v2046
    %v2048 = vadd.f32 %v1993, %v2047
    %v2049 = vtanh.pop %v2048
    %v2050 = vsub.f32 1.0, %v2045
    %v2051 = vmul.f32 %v2050, %v2049
    %v2052 = vmul.f32 %v2045, %v1990
    %v2053 = vadd.f32 %v2051, %v2052
    %2054 = vst [vmem:[%s9] sm:$0xff] %v2053
    // Predicated region
    $region54: #{gru_forward.1} parent=1 // pred_check
      _
    $region55: #{gru_forward.1} parent=1 // pred_check_branch
      %2056 = sbr.rel (0) target = $region57
    $region56: #{gru_forward.1} parent=1 // pred_region
      _
    $region57: #{gru_forward.1} parent=1 // pred_fallthru
      _
    // Predicated region
    $region58: #{gru_forward.1} parent=1 // pred_check
      _
    $region59: #{gru_forward.1} parent=1 // pred_check_branch
      %2058 = sbr.rel (0) target = $region61
    $region60: #{gru_forward.1} parent=1 // pred_region
      _
    $region61: #{gru_forward.1} parent=1 // pred_fallthru
      _
    %2059 = vsyncpa [#allocation5], 1
    %2060 = vsyncpa [#allocation7], 1
    %2061 = vsyncpa [#allocation10], 1

</llo_original>
